<compile_context>
chip_gen: v6e
topology: v6e:2x2x1
jax: 0.10.0
libtpu: 0.0.40
codegen_flags: <defaults>
</compile_context>

<pallas_src>
import functools

import jax
import jax.numpy as jnp
from jax import lax
from jax.experimental import pallas as pl
from jax.experimental.pallas import tpu as pltpu


def _elr_kernel(index_ref, label_ref, true_ref, logits_ref, info_ref,
                target_in_ref,                      # aliased HBM target (input)
                target_out_ref, packed_ref,         # outputs
                tgt_vmem, dma_sems,                 # scratch
                *, beta: float, lambda_: float):
    b, c = logits_ref.shape

    # ---- hoist every scalar index read (before any DMA wait) -------------
    idx = [index_ref[i] for i in range(b)]

    # contiguity check: index == [idx0, idx0+1, ..., idx0+b-1]
    is_contig = idx[b - 1] == idx[0] + (b - 1)
    for i in range(1, b - 1):
        is_contig = jnp.logical_and(is_contig, idx[i] == idx[0] + i)
    not_contig = jnp.logical_not(is_contig)

    # ---- gather target[index]: HBM -> VMEM (coalesced fast path) ---------
    gather_all = pltpu.make_async_copy(
        target_in_ref.at[pl.ds(idx[0], b), :], tgt_vmem, dma_sems.at[0])
    row_gathers = [
        pltpu.make_async_copy(target_in_ref.at[pl.ds(idx[i], 1), :],
                              tgt_vmem.at[pl.ds(i, 1), :], dma_sems.at[i])
        for i in range(b)]

    @pl.when(is_contig)
    def _():
        gather_all.start()

    @pl.when(not_contig)
    def _():
        for cp in row_gathers:
            cp.start()

    # ============ target-INDEPENDENT compute (hides the gather) ===========
    logits = logits_ref[...].astype(jnp.float32)            # (B, C)
    info = info_ref[...].astype(jnp.float32)                # (B, 1)
    inv_b = jnp.float32(1.0 / b)
    eps = jnp.float32(1e-8)

    cls = lax.broadcasted_iota(jnp.int32, (b, c), 1)
    y_label = (cls == label_ref[...]).astype(jnp.float32)   # one-hot(label)
    true_oh = (cls == true_ref[...]).astype(jnp.float32)    # one-hot(true_class)
    # one-hot(label) gathered at true_class == (label == true_class)
    y_true = (label_ref[...] == true_ref[...]).astype(jnp.float32)   # (B, 1)

    # softmax + clamp (approx reciprocal: loss-only error, cancels in renorm)
    m = jnp.max(logits, axis=1, keepdims=True)               # (B, 1)
    e = jnp.exp(logits - m)
    denom = jnp.sum(e, axis=1, keepdims=True)                # (B, 1)
    y_pred = jnp.clip(e * pl.reciprocal(denom, approx=True), 1e-4, 1.0 - 1e-4)

    # renormalized probs feeding the PERSISTENT EMA target: exact division
    norm = y_pred / jnp.sum(y_pred, axis=1, keepdims=True)   # (B, C)

    # per-row prob at the true class (target-independent part of the weight)
    p_true = jnp.sum(y_pred * true_oh, axis=1, keepdims=True)  # (B, 1)

    # cross-entropy pieces
    lse = m + jnp.log(denom)                                  # (B, 1) logsumexp
    logit_at_label = jnp.sum(logits * y_label, axis=1, keepdims=True)
    ce = jnp.sum(lse - logit_at_label, axis=0, keepdims=True) * inv_b   # (1, 1)

    # info statistics for evaluate()
    sum_info = jnp.sum(info, axis=0, keepdims=True)           # (1, 1)
    norm_info = jnp.sqrt(jnp.sum(info * info, axis=0, keepdims=True))

    # ============ wait for the gathered target rows ========================
    @pl.when(is_contig)
    def _():
        gather_all.wait()

    @pl.when(not_contig)
    def _():
        for cp in row_gathers:
            cp.wait()

    tgt = tgt_vmem[...]                                       # (B, C) target[index]

    # ---- ELR running-target update (num_views == 1 branch) ---------------
    new_tgt = beta * tgt + (1.0 - beta) * norm                # (B, C)
    tgt_vmem[...] = new_tgt                                   # staged for scatter

    # Start the scatter right away; the epilogue below covers the write
    # latency.  All gather waits finished above, so the read-before-write
    # invariant on the aliased HBM buffer is preserved.
    scatter_all = pltpu.make_async_copy(
        tgt_vmem, target_out_ref.at[pl.ds(idx[0], b), :], dma_sems.at[0])
    row_scatters = [
        pltpu.make_async_copy(tgt_vmem.at[pl.ds(i, 1), :],
                              target_out_ref.at[pl.ds(idx[i], 1), :],
                              dma_sems.at[i])
        for i in range(b)]

    @pl.when(is_contig)
    def _():
        scatter_all.start()

    @pl.when(not_contig)
    def _():
        for cp in row_scatters:
            cp.start()

    # ============ target-DEPENDENT epilogue (hides the scatter) ===========
    s = jnp.sum(new_tgt * y_pred, axis=1, keepdims=True)       # (B, 1)
    t_true = jnp.sum(new_tgt * true_oh, axis=1, keepdims=True) # (B, 1)
    inv_one_minus_s = 1.0 / (1.0 - s)                          # exact division

    # only the true-class column of elr_grad survives the gather
    weight = jnp.abs(p_true - y_true
                     + lambda_ * p_true * inv_one_minus_s * (s - t_true * p_true))

    # evaluate(): cosine similarities + weight change (algebraic form)
    sum_w = jnp.sum(weight, axis=0, keepdims=True)             # (1, 1)
    w_mean = sum_w * inv_b
    sum_wi = jnp.sum(weight * info, axis=0, keepdims=True)     # (1, 1)
    norm_w = jnp.sqrt(jnp.sum(weight * weight, axis=0, keepdims=True))
    cos_wi = sum_wi / jnp.maximum(norm_w * norm_info, eps)
    # cos(full_like(weight, w_mean), info): ||const|| = |w_mean| * sqrt(B)
    norm_const = jnp.abs(w_mean) * jnp.float32(float(b) ** 0.5)
    cos_ci = (w_mean * sum_info) / jnp.maximum(norm_const * norm_info, eps)
    sim = cos_wi - cos_ci                                       # (1, 1)
    wht = sum_wi - w_mean * sum_info                            # (1, 1)

    # cross entropy (mean) + ELR regularizer
    elr_reg = jnp.sum(jnp.log(1.0 - s), axis=0, keepdims=True) * inv_b
    loss = ce + lambda_ * elr_reg                               # (1, 1)

    # ---- single packed scalar output: [loss, sim, wht] -------------------
    # (kept as a select-pack into one small VMEM row; an SMEM scalar output
    #  would need a vreg->sreg extract, not worth the lowering risk here)
    lane = lax.broadcasted_iota(jnp.int32, (1, 3), 1)
    packed_ref[...] = jnp.where(lane == 0, loss,
                                jnp.where(lane == 1, sim, wht))

    # ---- drain the scatter ------------------------------------------------
    @pl.when(is_contig)
    def _():
        scatter_all.wait()

    @pl.when(not_contig)
    def _():
        for cp in row_scatters:
            cp.wait()


def _elr_forward_impl(target, index, output, label, noise_info, true_class,
                      num_classes, beta, lambda_):
    """Functional elr_loss.forward (num_views == 1).

    Returns (final_loss, elr_sim, elr_wht, new_target). `target` is updated
    in place when this function is jitted with the target argument donated.
    """
    b, c = output.shape
    assert c == num_classes
    n_examp = target.shape[0]

    index_i32 = index.astype(jnp.int32)
    label2d = label.reshape(b, 1).astype(jnp.int32)
    true2d = true_class.reshape(b, 1).astype(jnp.int32)
    info2d = noise_info.reshape(b, 1).astype(jnp.float32)

    kernel = functools.partial(_elr_kernel, beta=float(beta),
                               lambda_=float(lambda_))

    vmem = pl.BlockSpec(memory_space=pltpu.MemorySpace.VMEM)
    smem = pl.BlockSpec(memory_space=pltpu.MemorySpace.SMEM)
    anyspace = pl.BlockSpec(memory_space=pl.ANY)

    new_target, packed = pl.pallas_call(
        kernel,
        out_shape=(
            jax.ShapeDtypeStruct((n_examp, c), jnp.float32),  # aliased target
            jax.ShapeDtypeStruct((1, 3), jnp.float32),        # [loss, sim, wht]
        ),
        in_specs=[smem, vmem, vmem, vmem, vmem, anyspace],
        out_specs=(anyspace, vmem),
        scratch_shapes=[
            pltpu.VMEM((b, c), jnp.float32),      # gathered / updated rows
            pltpu.SemaphoreType.DMA((b,)),        # DMA semaphores
        ],
        input_output_aliases={5: 0},              # target updated in place
        compiler_params=pltpu.CompilerParams(
            vmem_limit_bytes=32 * 1024 * 1024),   # tiny footprint; safe on v7x
    )(index_i32, label2d, true2d, output, info2d, target)

    return packed[0, 0], packed[0, 1], packed[0, 2], new_target


# target (arg 0) is donated so the in-kernel scatter is a true in-place update.
elr_loss_forward = jax.jit(_elr_forward_impl,
                           static_argnums=(6, 7, 8),
                           donate_argnums=(0,))


if __name__ == "__main__":
    num_examp = 16
    num_classes = 10
    batch = 8

    key = jax.random.PRNGKey(0)
    k1, k2, k3, k4 = jax.random.split(key, 4)

    output = jax.random.normal(k1, (batch, num_classes), dtype=jnp.float32)
    label = jax.random.randint(k2, (batch,), 0, num_classes, dtype=jnp.int32)
    true_class = jax.random.randint(k3, (batch,), 0, num_classes, dtype=jnp.int32)
    noise_info = jax.random.normal(k4, (batch,), dtype=jnp.float32)
    index = jnp.arange(batch, dtype=jnp.int32)
    target = jnp.zeros((num_examp, num_classes), dtype=jnp.float32)

    final_loss, elr_sim, elr_wht, new_target = elr_loss_forward(
        target, index, output, label, noise_info, true_class,
        num_classes, 0.3, 3.0)

    jax.block_until_ready((final_loss, elr_sim, elr_wht, new_target))
    print("KERNEL_OK")
</pallas_src>

<mosaic_0001>
module attributes {stable_mosaic.version = 11 : i64} {
  func.func @_elr_kernel(%arg0: memref<8xi32, #tpu.memory_space<smem>>, %arg1: memref<8x1xi32, #tpu.memory_space<vmem>>, %arg2: memref<8x1xi32, #tpu.memory_space<vmem>>, %arg3: memref<8x10xf32, #tpu.memory_space<vmem>>, %arg4: memref<8x1xf32, #tpu.memory_space<vmem>>, %arg5: memref<16x10xf32, #tpu.memory_space<any>>, %arg6: memref<16x10xf32, #tpu.memory_space<any>>, %arg7: memref<1x3xf32, #tpu.memory_space<vmem>>, %arg8: memref<8x10xf32, #tpu.memory_space<vmem>>, %arg9: memref<8x!tpu.dma_semaphore, #tpu.memory_space<semaphore_mem>>) attributes {dimension_semantics = [], scalar_prefetch = 0 : i64, scratch_operands = 2 : i64, tpu.core_type = #tpu.core_type<tc>} {
    %c0 = arith.constant 0 : index
    %0 = memref.load %arg0[%c0] : memref<8xi32, #tpu.memory_space<smem>>
    %c1 = arith.constant 1 : index
    %1 = memref.load %arg0[%c1] : memref<8xi32, #tpu.memory_space<smem>>
    %c2 = arith.constant 2 : index
    %2 = memref.load %arg0[%c2] : memref<8xi32, #tpu.memory_space<smem>>
    %c3 = arith.constant 3 : index
    %3 = memref.load %arg0[%c3] : memref<8xi32, #tpu.memory_space<smem>>
    %c4 = arith.constant 4 : index
    %4 = memref.load %arg0[%c4] : memref<8xi32, #tpu.memory_space<smem>>
    %c5 = arith.constant 5 : index
    %5 = memref.load %arg0[%c5] : memref<8xi32, #tpu.memory_space<smem>>
    %c6 = arith.constant 6 : index
    %6 = memref.load %arg0[%c6] : memref<8xi32, #tpu.memory_space<smem>>
    %c7 = arith.constant 7 : index
    %7 = memref.load %arg0[%c7] : memref<8xi32, #tpu.memory_space<smem>>
    %c7_i32 = arith.constant 7 : i32
    %8 = arith.addi %0, %c7_i32 : i32
    %9 = arith.cmpi eq, %7, %8 : i32
    %c1_i32 = arith.constant 1 : i32
    %10 = arith.addi %0, %c1_i32 : i32
    %11 = arith.cmpi eq, %1, %10 : i32
    %12 = arith.andi %9, %11 : i1
    %c2_i32 = arith.constant 2 : i32
    %13 = arith.addi %0, %c2_i32 : i32
    %14 = arith.cmpi eq, %2, %13 : i32
    %15 = arith.andi %12, %14 : i1
    %c3_i32 = arith.constant 3 : i32
    %16 = arith.addi %0, %c3_i32 : i32
    %17 = arith.cmpi eq, %3, %16 : i32
    %18 = arith.andi %15, %17 : i1
    %c4_i32 = arith.constant 4 : i32
    %19 = arith.addi %0, %c4_i32 : i32
    %20 = arith.cmpi eq, %4, %19 : i32
    %21 = arith.andi %18, %20 : i1
    %c5_i32 = arith.constant 5 : i32
    %22 = arith.addi %0, %c5_i32 : i32
    %23 = arith.cmpi eq, %5, %22 : i32
    %24 = arith.andi %21, %23 : i1
    %c6_i32 = arith.constant 6 : i32
    %25 = arith.addi %0, %c6_i32 : i32
    %26 = arith.cmpi eq, %6, %25 : i32
    %27 = arith.andi %24, %26 : i1
    %true = arith.constant true
    %28 = arith.xori %27, %true : i1
    %29 = arith.extui %27 : i1 to i32
    %c0_i32 = arith.constant 0 : i32
    %c0_i32_0 = arith.constant 0 : i32
    %30 = arith.cmpi ne, %29, %c0_i32_0 : i32
    scf.if %30 {
      %c0_i32_91 = arith.constant 0 : i32
      %176 = tpu.memref_slice %arg5[%0, %c0_i32_91] : memref<16x10xf32, #tpu.memory_space<any>> -> memref<8x10xf32, #tpu.memory_space<any>>
      %177 = tpu.memref_slice %arg9[%c0_i32] : memref<8x!tpu.dma_semaphore, #tpu.memory_space<semaphore_mem>> -> memref<1x!tpu.dma_semaphore, #tpu.memory_space<semaphore_mem>>
      %178 = tpu.memref_squeeze %177 : memref<1x!tpu.dma_semaphore, #tpu.memory_space<semaphore_mem>> -> memref<!tpu.dma_semaphore, #tpu.memory_space<semaphore_mem>>
      tpu.enqueue_dma source(%176 : memref<8x10xf32, #tpu.memory_space<any>>) target(%arg8 : memref<8x10xf32, #tpu.memory_space<vmem>>) target_semaphore(%178 : memref<!tpu.dma_semaphore, #tpu.memory_space<semaphore_mem>>)
    } else {
    }
    %31 = arith.extui %28 : i1 to i32
    %c0_i32_1 = arith.constant 0 : i32
    %c1_i32_2 = arith.constant 1 : i32
    %c2_i32_3 = arith.constant 2 : i32
    %c3_i32_4 = arith.constant 3 : i32
    %c4_i32_5 = arith.constant 4 : i32
    %c5_i32_6 = arith.constant 5 : i32
    %c6_i32_7 = arith.constant 6 : i32
    %c7_i32_8 = arith.constant 7 : i32
    %c0_i32_9 = arith.constant 0 : i32
    %32 = arith.cmpi ne, %31, %c0_i32_9 : i32
    scf.if %32 {
      %c0_i32_91 = arith.constant 0 : i32
      %176 = tpu.memref_slice %arg5[%0, %c0_i32_91] : memref<16x10xf32, #tpu.memory_space<any>> -> memref<1x10xf32, #tpu.memory_space<any>>
      %c0_i32_92 = arith.constant 0 : i32
      %c0_i32_93 = arith.constant 0 : i32
      %177 = tpu.memref_slice %arg8[%c0_i32_92, %c0_i32_93] : memref<8x10xf32, #tpu.memory_space<vmem>> -> memref<1x10xf32, #tpu.memory_space<vmem>>
      %178 = tpu.memref_slice %arg9[%c0_i32_1] : memref<8x!tpu.dma_semaphore, #tpu.memory_space<semaphore_mem>> -> memref<1x!tpu.dma_semaphore, #tpu.memory_space<semaphore_mem>>
      %179 = tpu.memref_squeeze %178 : memref<1x!tpu.dma_semaphore, #tpu.memory_space<semaphore_mem>> -> memref<!tpu.dma_semaphore, #tpu.memory_space<semaphore_mem>>
      tpu.enqueue_dma source(%176 : memref<1x10xf32, #tpu.memory_space<any>>) target(%177 : memref<1x10xf32, #tpu.memory_space<vmem>>) target_semaphore(%179 : memref<!tpu.dma_semaphore, #tpu.memory_space<semaphore_mem>>)
      %c0_i32_94 = arith.constant 0 : i32
      %180 = tpu.memref_slice %arg5[%1, %c0_i32_94] : memref<16x10xf32, #tpu.memory_space<any>> -> memref<1x10xf32, #tpu.memory_space<any>>
      %c1_i32_95 = arith.constant 1 : i32
      %c0_i32_96 = arith.constant 0 : i32
      %181 = tpu.memref_slice %arg8[%c1_i32_95, %c0_i32_96] : memref<8x10xf32, #tpu.memory_space<vmem>> -> memref<1x10xf32, #tpu.memory_space<vmem>>
      %182 = tpu.memref_slice %arg9[%c1_i32_2] : memref<8x!tpu.dma_semaphore, #tpu.memory_space<semaphore_mem>> -> memref<1x!tpu.dma_semaphore, #tpu.memory_space<semaphore_mem>>
      %183 = tpu.memref_squeeze %182 : memref<1x!tpu.dma_semaphore, #tpu.memory_space<semaphore_mem>> -> memref<!tpu.dma_semaphore, #tpu.memory_space<semaphore_mem>>
      tpu.enqueue_dma source(%180 : memref<1x10xf32, #tpu.memory_space<any>>) target(%181 : memref<1x10xf32, #tpu.memory_space<vmem>>) target_semaphore(%183 : memref<!tpu.dma_semaphore, #tpu.memory_space<semaphore_mem>>)
      %c0_i32_97 = arith.constant 0 : i32
      %184 = tpu.memref_slice %arg5[%2, %c0_i32_97] : memref<16x10xf32, #tpu.memory_space<any>> -> memref<1x10xf32, #tpu.memory_space<any>>
      %c2_i32_98 = arith.constant 2 : i32
      %c0_i32_99 = arith.constant 0 : i32
      %185 = tpu.memref_slice %arg8[%c2_i32_98, %c0_i32_99] : memref<8x10xf32, #tpu.memory_space<vmem>> -> memref<1x10xf32, #tpu.memory_space<vmem>>
      %186 = tpu.memref_slice %arg9[%c2_i32_3] : memref<8x!tpu.dma_semaphore, #tpu.memory_space<semaphore_mem>> -> memref<1x!tpu.dma_semaphore, #tpu.memory_space<semaphore_mem>>
      %187 = tpu.memref_squeeze %186 : memref<1x!tpu.dma_semaphore, #tpu.memory_space<semaphore_mem>> -> memref<!tpu.dma_semaphore, #tpu.memory_space<semaphore_mem>>
      tpu.enqueue_dma source(%184 : memref<1x10xf32, #tpu.memory_space<any>>) target(%185 : memref<1x10xf32, #tpu.memory_space<vmem>>) target_semaphore(%187 : memref<!tpu.dma_semaphore, #tpu.memory_space<semaphore_mem>>)
      %c0_i32_100 = arith.constant 0 : i32
      %188 = tpu.memref_slice %arg5[%3, %c0_i32_100] : memref<16x10xf32, #tpu.memory_space<any>> -> memref<1x10xf32, #tpu.memory_space<any>>
      %c3_i32_101 = arith.constant 3 : i32
      %c0_i32_102 = arith.constant 0 : i32
      %189 = tpu.memref_slice %arg8[%c3_i32_101, %c0_i32_102] : memref<8x10xf32, #tpu.memory_space<vmem>> -> memref<1x10xf32, #tpu.memory_space<vmem>>
      %190 = tpu.memref_slice %arg9[%c3_i32_4] : memref<8x!tpu.dma_semaphore, #tpu.memory_space<semaphore_mem>> -> memref<1x!tpu.dma_semaphore, #tpu.memory_space<semaphore_mem>>
      %191 = tpu.memref_squeeze %190 : memref<1x!tpu.dma_semaphore, #tpu.memory_space<semaphore_mem>> -> memref<!tpu.dma_semaphore, #tpu.memory_space<semaphore_mem>>
      tpu.enqueue_dma source(%188 : memref<1x10xf32, #tpu.memory_space<any>>) target(%189 : memref<1x10xf32, #tpu.memory_space<vmem>>) target_semaphore(%191 : memref<!tpu.dma_semaphore, #tpu.memory_space<semaphore_mem>>)
      %c0_i32_103 = arith.constant 0 : i32
      %192 = tpu.memref_slice %arg5[%4, %c0_i32_103] : memref<16x10xf32, #tpu.memory_space<any>> -> memref<1x10xf32, #tpu.memory_space<any>>
      %c4_i32_104 = arith.constant 4 : i32
      %c0_i32_105 = arith.constant 0 : i32
      %193 = tpu.memref_slice %arg8[%c4_i32_104, %c0_i32_105] : memref<8x10xf32, #tpu.memory_space<vmem>> -> memref<1x10xf32, #tpu.memory_space<vmem>>
      %194 = tpu.memref_slice %arg9[%c4_i32_5] : memref<8x!tpu.dma_semaphore, #tpu.memory_space<semaphore_mem>> -> memref<1x!tpu.dma_semaphore, #tpu.memory_space<semaphore_mem>>
      %195 = tpu.memref_squeeze %194 : memref<1x!tpu.dma_semaphore, #tpu.memory_space<semaphore_mem>> -> memref<!tpu.dma_semaphore, #tpu.memory_space<semaphore_mem>>
      tpu.enqueue_dma source(%192 : memref<1x10xf32, #tpu.memory_space<any>>) target(%193 : memref<1x10xf32, #tpu.memory_space<vmem>>) target_semaphore(%195 : memref<!tpu.dma_semaphore, #tpu.memory_space<semaphore_mem>>)
      %c0_i32_106 = arith.constant 0 : i32
      %196 = tpu.memref_slice %arg5[%5, %c0_i32_106] : memref<16x10xf32, #tpu.memory_space<any>> -> memref<1x10xf32, #tpu.memory_space<any>>
      %c5_i32_107 = arith.constant 5 : i32
      %c0_i32_108 = arith.constant 0 : i32
      %197 = tpu.memref_slice %arg8[%c5_i32_107, %c0_i32_108] : memref<8x10xf32, #tpu.memory_space<vmem>> -> memref<1x10xf32, #tpu.memory_space<vmem>>
      %198 = tpu.memref_slice %arg9[%c5_i32_6] : memref<8x!tpu.dma_semaphore, #tpu.memory_space<semaphore_mem>> -> memref<1x!tpu.dma_semaphore, #tpu.memory_space<semaphore_mem>>
      %199 = tpu.memref_squeeze %198 : memref<1x!tpu.dma_semaphore, #tpu.memory_space<semaphore_mem>> -> memref<!tpu.dma_semaphore, #tpu.memory_space<semaphore_mem>>
      tpu.enqueue_dma source(%196 : memref<1x10xf32, #tpu.memory_space<any>>) target(%197 : memref<1x10xf32, #tpu.memory_space<vmem>>) target_semaphore(%199 : memref<!tpu.dma_semaphore, #tpu.memory_space<semaphore_mem>>)
      %c0_i32_109 = arith.constant 0 : i32
      %200 = tpu.memref_slice %arg5[%6, %c0_i32_109] : memref<16x10xf32, #tpu.memory_space<any>> -> memref<1x10xf32, #tpu.memory_space<any>>
      %c6_i32_110 = arith.constant 6 : i32
      %c0_i32_111 = arith.constant 0 : i32
      %201 = tpu.memref_slice %arg8[%c6_i32_110, %c0_i32_111] : memref<8x10xf32, #tpu.memory_space<vmem>> -> memref<1x10xf32, #tpu.memory_space<vmem>>
      %202 = tpu.memref_slice %arg9[%c6_i32_7] : memref<8x!tpu.dma_semaphore, #tpu.memory_space<semaphore_mem>> -> memref<1x!tpu.dma_semaphore, #tpu.memory_space<semaphore_mem>>
      %203 = tpu.memref_squeeze %202 : memref<1x!tpu.dma_semaphore, #tpu.memory_space<semaphore_mem>> -> memref<!tpu.dma_semaphore, #tpu.memory_space<semaphore_mem>>
      tpu.enqueue_dma source(%200 : memref<1x10xf32, #tpu.memory_space<any>>) target(%201 : memref<1x10xf32, #tpu.memory_space<vmem>>) target_semaphore(%203 : memref<!tpu.dma_semaphore, #tpu.memory_space<semaphore_mem>>)
      %c0_i32_112 = arith.constant 0 : i32
      %204 = tpu.memref_slice %arg5[%7, %c0_i32_112] : memref<16x10xf32, #tpu.memory_space<any>> -> memref<1x10xf32, #tpu.memory_space<any>>
      %c7_i32_113 = arith.constant 7 : i32
      %c0_i32_114 = arith.constant 0 : i32
      %205 = tpu.memref_slice %arg8[%c7_i32_113, %c0_i32_114] : memref<8x10xf32, #tpu.memory_space<vmem>> -> memref<1x10xf32, #tpu.memory_space<vmem>>
      %206 = tpu.memref_slice %arg9[%c7_i32_8] : memref<8x!tpu.dma_semaphore, #tpu.memory_space<semaphore_mem>> -> memref<1x!tpu.dma_semaphore, #tpu.memory_space<semaphore_mem>>
      %207 = tpu.memref_squeeze %206 : memref<1x!tpu.dma_semaphore, #tpu.memory_space<semaphore_mem>> -> memref<!tpu.dma_semaphore, #tpu.memory_space<semaphore_mem>>
      tpu.enqueue_dma source(%204 : memref<1x10xf32, #tpu.memory_space<any>>) target(%205 : memref<1x10xf32, #tpu.memory_space<vmem>>) target_semaphore(%207 : memref<!tpu.dma_semaphore, #tpu.memory_space<semaphore_mem>>)
    } else {
    }
    %c0_10 = arith.constant 0 : index
    %c0_11 = arith.constant 0 : index
    %33 = vector.load %arg3[%c0_10, %c0_11] : memref<8x10xf32, #tpu.memory_space<vmem>>, vector<8x10xf32>
    %c0_12 = arith.constant 0 : index
    %c0_13 = arith.constant 0 : index
    %34 = vector.load %arg4[%c0_12, %c0_13] : memref<8x1xf32, #tpu.memory_space<vmem>>, vector<8x1xf32>
    %35 = tpu.iota {dimensions = array<i32: 1>} : vector<8x10xi32>
    %c0_14 = arith.constant 0 : index
    %c0_15 = arith.constant 0 : index
    %36 = vector.load %arg1[%c0_14, %c0_15] : memref<8x1xi32, #tpu.memory_space<vmem>>, vector<8x1xi32>
    %37 = vector.broadcast %36 : vector<8x1xi32> to vector<8x10xi32>
    %38 = arith.cmpi eq, %35, %37 : vector<8x10xi32>
    %39 = arith.extui %38 : vector<8x10xi1> to vector<8x10xi32>
    %40 = arith.sitofp %39 : vector<8x10xi32> to vector<8x10xf32>
    %c0_16 = arith.constant 0 : index
    %c0_17 = arith.constant 0 : index
    %41 = vector.load %arg2[%c0_16, %c0_17] : memref<8x1xi32, #tpu.memory_space<vmem>>, vector<8x1xi32>
    %42 = vector.broadcast %41 : vector<8x1xi32> to vector<8x10xi32>
    %43 = arith.cmpi eq, %35, %42 : vector<8x10xi32>
    %44 = arith.extui %43 : vector<8x10xi1> to vector<8x10xi32>
    %45 = arith.sitofp %44 : vector<8x10xi32> to vector<8x10xf32>
    %c0_18 = arith.constant 0 : index
    %c0_19 = arith.constant 0 : index
    %46 = vector.load %arg1[%c0_18, %c0_19] : memref<8x1xi32, #tpu.memory_space<vmem>>, vector<8x1xi32>
    %c0_20 = arith.constant 0 : index
    %c0_21 = arith.constant 0 : index
    %47 = vector.load %arg2[%c0_20, %c0_21] : memref<8x1xi32, #tpu.memory_space<vmem>>, vector<8x1xi32>
    %48 = arith.cmpi eq, %46, %47 : vector<8x1xi32>
    %49 = arith.extui %48 : vector<8x1xi1> to vector<8x1xi32>
    %50 = arith.sitofp %49 : vector<8x1xi32> to vector<8x1xf32>
    %cst = arith.constant dense<0xFF800000> : vector<8xf32>
    %51 = vector.multi_reduction <maximumf>, %33, %cst [1] : vector<8x10xf32> to vector<8xf32>
    %52 = vector.shape_cast %51 : vector<8xf32> to vector<8x1xf32>
    %53 = vector.broadcast %52 : vector<8x1xf32> to vector<8x10xf32>
    %54 = arith.subf %33, %53 : vector<8x10xf32>
    %55 = math.exp %54 : vector<8x10xf32>
    %cst_22 = arith.constant dense<0.000000e+00> : vector<8xf32>
    %56 = vector.multi_reduction <add>, %55, %cst_22 [1] : vector<8x10xf32> to vector<8xf32>
    %57 = vector.shape_cast %56 : vector<8xf32> to vector<8x1xf32>
    %58 = tpu.reciprocal %57 {approx = true} : vector<8x1xf32> -> vector<8x1xf32>
    %59 = vector.broadcast %58 : vector<8x1xf32> to vector<8x10xf32>
    %60 = arith.mulf %55, %59 : vector<8x10xf32>
    %cst_23 = arith.constant 9.99999974E-5 : f32
    %cst_24 = arith.constant 0.999899983 : f32
    %61 = vector.broadcast %cst_23 : f32 to vector<8x10xf32>
    %62 = arith.maximumf %61, %60 : vector<8x10xf32>
    %63 = vector.broadcast %cst_24 : f32 to vector<8x10xf32>
    %64 = arith.minimumf %63, %62 : vector<8x10xf32>
    %cst_25 = arith.constant dense<0.000000e+00> : vector<8xf32>
    %65 = vector.multi_reduction <add>, %64, %cst_25 [1] : vector<8x10xf32> to vector<8xf32>
    %66 = vector.shape_cast %65 : vector<8xf32> to vector<8x1xf32>
    %67 = vector.broadcast %66 : vector<8x1xf32> to vector<8x10xf32>
    %68 = arith.divf %64, %67 : vector<8x10xf32>
    %69 = arith.mulf %64, %45 : vector<8x10xf32>
    %cst_26 = arith.constant dense<0.000000e+00> : vector<8xf32>
    %70 = vector.multi_reduction <add>, %69, %cst_26 [1] : vector<8x10xf32> to vector<8xf32>
    %71 = vector.shape_cast %70 : vector<8xf32> to vector<8x1xf32>
    %72 = math.log %57 : vector<8x1xf32>
    %73 = arith.addf %52, %72 : vector<8x1xf32>
    %74 = arith.mulf %33, %40 : vector<8x10xf32>
    %cst_27 = arith.constant dense<0.000000e+00> : vector<8xf32>
    %75 = vector.multi_reduction <add>, %74, %cst_27 [1] : vector<8x10xf32> to vector<8xf32>
    %76 = vector.shape_cast %75 : vector<8xf32> to vector<8x1xf32>
    %77 = arith.subf %73, %76 : vector<8x1xf32>
    %cst_28 = arith.constant dense<0.000000e+00> : vector<1xf32>
    %78 = vector.multi_reduction <add>, %77, %cst_28 [0] : vector<8x1xf32> to vector<1xf32>
    %79 = vector.shape_cast %78 : vector<1xf32> to vector<1x1xf32>
    %cst_29 = arith.constant 1.250000e-01 : f32
    %80 = vector.broadcast %cst_29 : f32 to vector<1x1xf32>
    %81 = arith.mulf %79, %80 : vector<1x1xf32>
    %cst_30 = arith.constant dense<0.000000e+00> : vector<1xf32>
    %82 = vector.multi_reduction <add>, %34, %cst_30 [0] : vector<8x1xf32> to vector<1xf32>
    %83 = vector.shape_cast %82 : vector<1xf32> to vector<1x1xf32>
    %84 = arith.mulf %34, %34 : vector<8x1xf32>
    %cst_31 = arith.constant dense<0.000000e+00> : vector<1xf32>
    %85 = vector.multi_reduction <add>, %84, %cst_31 [0] : vector<8x1xf32> to vector<1xf32>
    %86 = vector.shape_cast %85 : vector<1xf32> to vector<1x1xf32>
    %87 = math.sqrt %86 : vector<1x1xf32>
    %88 = arith.extui %27 : i1 to i32
    %c0_i32_32 = arith.constant 0 : i32
    %c0_i32_33 = arith.constant 0 : i32
    %89 = arith.cmpi ne, %88, %c0_i32_33 : i32
    scf.if %89 {
      %c0_i32_91 = arith.constant 0 : i32
      %176 = tpu.memref_slice %arg5[%0, %c0_i32_91] : memref<16x10xf32, #tpu.memory_space<any>> -> memref<8x10xf32, #tpu.memory_space<any>>
      %177 = tpu.memref_slice %arg9[%c0_i32_32] : memref<8x!tpu.dma_semaphore, #tpu.memory_space<semaphore_mem>> -> memref<1x!tpu.dma_semaphore, #tpu.memory_space<semaphore_mem>>
      %178 = tpu.memref_squeeze %177 : memref<1x!tpu.dma_semaphore, #tpu.memory_space<semaphore_mem>> -> memref<!tpu.dma_semaphore, #tpu.memory_space<semaphore_mem>>
      tpu.wait_dma2 semaphore(%178 : memref<!tpu.dma_semaphore, #tpu.memory_space<semaphore_mem>>) src(%176 : memref<8x10xf32, #tpu.memory_space<any>>) dst(%arg8 : memref<8x10xf32, #tpu.memory_space<vmem>>)
    } else {
    }
    %90 = arith.extui %28 : i1 to i32
    %c0_i32_34 = arith.constant 0 : i32
    %c1_i32_35 = arith.constant 1 : i32
    %c2_i32_36 = arith.constant 2 : i32
    %c3_i32_37 = arith.constant 3 : i32
    %c4_i32_38 = arith.constant 4 : i32
    %c5_i32_39 = arith.constant 5 : i32
    %c6_i32_40 = arith.constant 6 : i32
    %c7_i32_41 = arith.constant 7 : i32
    %c0_i32_42 = arith.constant 0 : i32
    %91 = arith.cmpi ne, %90, %c0_i32_42 : i32
    scf.if %91 {
      %c0_i32_91 = arith.constant 0 : i32
      %176 = tpu.memref_slice %arg5[%0, %c0_i32_91] : memref<16x10xf32, #tpu.memory_space<any>> -> memref<1x10xf32, #tpu.memory_space<any>>
      %c0_i32_92 = arith.constant 0 : i32
      %c0_i32_93 = arith.constant 0 : i32
      %177 = tpu.memref_slice %arg8[%c0_i32_92, %c0_i32_93] : memref<8x10xf32, #tpu.memory_space<vmem>> -> memref<1x10xf32, #tpu.memory_space<vmem>>
      %178 = tpu.memref_slice %arg9[%c0_i32_34] : memref<8x!tpu.dma_semaphore, #tpu.memory_space<semaphore_mem>> -> memref<1x!tpu.dma_semaphore, #tpu.memory_space<semaphore_mem>>
      %179 = tpu.memref_squeeze %178 : memref<1x!tpu.dma_semaphore, #tpu.memory_space<semaphore_mem>> -> memref<!tpu.dma_semaphore, #tpu.memory_space<semaphore_mem>>
      tpu.wait_dma2 semaphore(%179 : memref<!tpu.dma_semaphore, #tpu.memory_space<semaphore_mem>>) src(%176 : memref<1x10xf32, #tpu.memory_space<any>>) dst(%177 : memref<1x10xf32, #tpu.memory_space<vmem>>)
      %c0_i32_94 = arith.constant 0 : i32
      %180 = tpu.memref_slice %arg5[%1, %c0_i32_94] : memref<16x10xf32, #tpu.memory_space<any>> -> memref<1x10xf32, #tpu.memory_space<any>>
      %c1_i32_95 = arith.constant 1 : i32
      %c0_i32_96 = arith.constant 0 : i32
      %181 = tpu.memref_slice %arg8[%c1_i32_95, %c0_i32_96] : memref<8x10xf32, #tpu.memory_space<vmem>> -> memref<1x10xf32, #tpu.memory_space<vmem>>
      %182 = tpu.memref_slice %arg9[%c1_i32_35] : memref<8x!tpu.dma_semaphore, #tpu.memory_space<semaphore_mem>> -> memref<1x!tpu.dma_semaphore, #tpu.memory_space<semaphore_mem>>
      %183 = tpu.memref_squeeze %182 : memref<1x!tpu.dma_semaphore, #tpu.memory_space<semaphore_mem>> -> memref<!tpu.dma_semaphore, #tpu.memory_space<semaphore_mem>>
      tpu.wait_dma2 semaphore(%183 : memref<!tpu.dma_semaphore, #tpu.memory_space<semaphore_mem>>) src(%180 : memref<1x10xf32, #tpu.memory_space<any>>) dst(%181 : memref<1x10xf32, #tpu.memory_space<vmem>>)
      %c0_i32_97 = arith.constant 0 : i32
      %184 = tpu.memref_slice %arg5[%2, %c0_i32_97] : memref<16x10xf32, #tpu.memory_space<any>> -> memref<1x10xf32, #tpu.memory_space<any>>
      %c2_i32_98 = arith.constant 2 : i32
      %c0_i32_99 = arith.constant 0 : i32
      %185 = tpu.memref_slice %arg8[%c2_i32_98, %c0_i32_99] : memref<8x10xf32, #tpu.memory_space<vmem>> -> memref<1x10xf32, #tpu.memory_space<vmem>>
      %186 = tpu.memref_slice %arg9[%c2_i32_36] : memref<8x!tpu.dma_semaphore, #tpu.memory_space<semaphore_mem>> -> memref<1x!tpu.dma_semaphore, #tpu.memory_space<semaphore_mem>>
      %187 = tpu.memref_squeeze %186 : memref<1x!tpu.dma_semaphore, #tpu.memory_space<semaphore_mem>> -> memref<!tpu.dma_semaphore, #tpu.memory_space<semaphore_mem>>
      tpu.wait_dma2 semaphore(%187 : memref<!tpu.dma_semaphore, #tpu.memory_space<semaphore_mem>>) src(%184 : memref<1x10xf32, #tpu.memory_space<any>>) dst(%185 : memref<1x10xf32, #tpu.memory_space<vmem>>)
      %c0_i32_100 = arith.constant 0 : i32
      %188 = tpu.memref_slice %arg5[%3, %c0_i32_100] : memref<16x10xf32, #tpu.memory_space<any>> -> memref<1x10xf32, #tpu.memory_space<any>>
      %c3_i32_101 = arith.constant 3 : i32
      %c0_i32_102 = arith.constant 0 : i32
      %189 = tpu.memref_slice %arg8[%c3_i32_101, %c0_i32_102] : memref<8x10xf32, #tpu.memory_space<vmem>> -> memref<1x10xf32, #tpu.memory_space<vmem>>
      %190 = tpu.memref_slice %arg9[%c3_i32_37] : memref<8x!tpu.dma_semaphore, #tpu.memory_space<semaphore_mem>> -> memref<1x!tpu.dma_semaphore, #tpu.memory_space<semaphore_mem>>
      %191 = tpu.memref_squeeze %190 : memref<1x!tpu.dma_semaphore, #tpu.memory_space<semaphore_mem>> -> memref<!tpu.dma_semaphore, #tpu.memory_space<semaphore_mem>>
      tpu.wait_dma2 semaphore(%191 : memref<!tpu.dma_semaphore, #tpu.memory_space<semaphore_mem>>) src(%188 : memref<1x10xf32, #tpu.memory_space<any>>) dst(%189 : memref<1x10xf32, #tpu.memory_space<vmem>>)
      %c0_i32_103 = arith.constant 0 : i32
      %192 = tpu.memref_slice %arg5[%4, %c0_i32_103] : memref<16x10xf32, #tpu.memory_space<any>> -> memref<1x10xf32, #tpu.memory_space<any>>
      %c4_i32_104 = arith.constant 4 : i32
      %c0_i32_105 = arith.constant 0 : i32
      %193 = tpu.memref_slice %arg8[%c4_i32_104, %c0_i32_105] : memref<8x10xf32, #tpu.memory_space<vmem>> -> memref<1x10xf32, #tpu.memory_space<vmem>>
      %194 = tpu.memref_slice %arg9[%c4_i32_38] : memref<8x!tpu.dma_semaphore, #tpu.memory_space<semaphore_mem>> -> memref<1x!tpu.dma_semaphore, #tpu.memory_space<semaphore_mem>>
      %195 = tpu.memref_squeeze %194 : memref<1x!tpu.dma_semaphore, #tpu.memory_space<semaphore_mem>> -> memref<!tpu.dma_semaphore, #tpu.memory_space<semaphore_mem>>
      tpu.wait_dma2 semaphore(%195 : memref<!tpu.dma_semaphore, #tpu.memory_space<semaphore_mem>>) src(%192 : memref<1x10xf32, #tpu.memory_space<any>>) dst(%193 : memref<1x10xf32, #tpu.memory_space<vmem>>)
      %c0_i32_106 = arith.constant 0 : i32
      %196 = tpu.memref_slice %arg5[%5, %c0_i32_106] : memref<16x10xf32, #tpu.memory_space<any>> -> memref<1x10xf32, #tpu.memory_space<any>>
      %c5_i32_107 = arith.constant 5 : i32
      %c0_i32_108 = arith.constant 0 : i32
      %197 = tpu.memref_slice %arg8[%c5_i32_107, %c0_i32_108] : memref<8x10xf32, #tpu.memory_space<vmem>> -> memref<1x10xf32, #tpu.memory_space<vmem>>
      %198 = tpu.memref_slice %arg9[%c5_i32_39] : memref<8x!tpu.dma_semaphore, #tpu.memory_space<semaphore_mem>> -> memref<1x!tpu.dma_semaphore, #tpu.memory_space<semaphore_mem>>
      %199 = tpu.memref_squeeze %198 : memref<1x!tpu.dma_semaphore, #tpu.memory_space<semaphore_mem>> -> memref<!tpu.dma_semaphore, #tpu.memory_space<semaphore_mem>>
      tpu.wait_dma2 semaphore(%199 : memref<!tpu.dma_semaphore, #tpu.memory_space<semaphore_mem>>) src(%196 : memref<1x10xf32, #tpu.memory_space<any>>) dst(%197 : memref<1x10xf32, #tpu.memory_space<vmem>>)
      %c0_i32_109 = arith.constant 0 : i32
      %200 = tpu.memref_slice %arg5[%6, %c0_i32_109] : memref<16x10xf32, #tpu.memory_space<any>> -> memref<1x10xf32, #tpu.memory_space<any>>
      %c6_i32_110 = arith.constant 6 : i32
      %c0_i32_111 = arith.constant 0 : i32
      %201 = tpu.memref_slice %arg8[%c6_i32_110, %c0_i32_111] : memref<8x10xf32, #tpu.memory_space<vmem>> -> memref<1x10xf32, #tpu.memory_space<vmem>>
      %202 = tpu.memref_slice %arg9[%c6_i32_40] : memref<8x!tpu.dma_semaphore, #tpu.memory_space<semaphore_mem>> -> memref<1x!tpu.dma_semaphore, #tpu.memory_space<semaphore_mem>>
      %203 = tpu.memref_squeeze %202 : memref<1x!tpu.dma_semaphore, #tpu.memory_space<semaphore_mem>> -> memref<!tpu.dma_semaphore, #tpu.memory_space<semaphore_mem>>
      tpu.wait_dma2 semaphore(%203 : memref<!tpu.dma_semaphore, #tpu.memory_space<semaphore_mem>>) src(%200 : memref<1x10xf32, #tpu.memory_space<any>>) dst(%201 : memref<1x10xf32, #tpu.memory_space<vmem>>)
      %c0_i32_112 = arith.constant 0 : i32
      %204 = tpu.memref_slice %arg5[%7, %c0_i32_112] : memref<16x10xf32, #tpu.memory_space<any>> -> memref<1x10xf32, #tpu.memory_space<any>>
      %c7_i32_113 = arith.constant 7 : i32
      %c0_i32_114 = arith.constant 0 : i32
      %205 = tpu.memref_slice %arg8[%c7_i32_113, %c0_i32_114] : memref<8x10xf32, #tpu.memory_space<vmem>> -> memref<1x10xf32, #tpu.memory_space<vmem>>
      %206 = tpu.memref_slice %arg9[%c7_i32_41] : memref<8x!tpu.dma_semaphore, #tpu.memory_space<semaphore_mem>> -> memref<1x!tpu.dma_semaphore, #tpu.memory_space<semaphore_mem>>
      %207 = tpu.memref_squeeze %206 : memref<1x!tpu.dma_semaphore, #tpu.memory_space<semaphore_mem>> -> memref<!tpu.dma_semaphore, #tpu.memory_space<semaphore_mem>>
      tpu.wait_dma2 semaphore(%207 : memref<!tpu.dma_semaphore, #tpu.memory_space<semaphore_mem>>) src(%204 : memref<1x10xf32, #tpu.memory_space<any>>) dst(%205 : memref<1x10xf32, #tpu.memory_space<vmem>>)
    } else {
    }
    %c0_43 = arith.constant 0 : index
    %c0_44 = arith.constant 0 : index
    %92 = vector.load %arg8[%c0_43, %c0_44] : memref<8x10xf32, #tpu.memory_space<vmem>>, vector<8x10xf32>
    %cst_45 = arith.constant 3.000000e-01 : f32
    %93 = vector.broadcast %cst_45 : f32 to vector<8x10xf32>
    %94 = arith.mulf %93, %92 : vector<8x10xf32>
    %cst_46 = arith.constant 0.699999988 : f32
    %95 = vector.broadcast %cst_46 : f32 to vector<8x10xf32>
    %96 = arith.mulf %95, %68 : vector<8x10xf32>
    %97 = arith.addf %94, %96 : vector<8x10xf32>
    %c0_47 = arith.constant 0 : index
    %c0_48 = arith.constant 0 : index
    %98 = vector.load %arg8[%c0_47, %c0_48] : memref<8x10xf32, #tpu.memory_space<vmem>>, vector<8x10xf32>
    tpu.vector_store %arg8[%c0_47, %c0_48], %97 {strides = array<i32>} : memref<8x10xf32, #tpu.memory_space<vmem>>, vector<8x10xf32>,
    %99 = arith.extui %27 : i1 to i32
    %c0_i32_49 = arith.constant 0 : i32
    %c0_i32_50 = arith.constant 0 : i32
    %100 = arith.cmpi ne, %99, %c0_i32_50 : i32
    scf.if %100 {
      %c0_i32_91 = arith.constant 0 : i32
      %176 = tpu.memref_slice %arg6[%0, %c0_i32_91] : memref<16x10xf32, #tpu.memory_space<any>> -> memref<8x10xf32, #tpu.memory_space<any>>
      %177 = tpu.memref_slice %arg9[%c0_i32_49] : memref<8x!tpu.dma_semaphore, #tpu.memory_space<semaphore_mem>> -> memref<1x!tpu.dma_semaphore, #tpu.memory_space<semaphore_mem>>
      %178 = tpu.memref_squeeze %177 : memref<1x!tpu.dma_semaphore, #tpu.memory_space<semaphore_mem>> -> memref<!tpu.dma_semaphore, #tpu.memory_space<semaphore_mem>>
      tpu.enqueue_dma source(%arg8 : memref<8x10xf32, #tpu.memory_space<vmem>>) target(%176 : memref<8x10xf32, #tpu.memory_space<any>>) target_semaphore(%178 : memref<!tpu.dma_semaphore, #tpu.memory_space<semaphore_mem>>)
    } else {
    }
    %101 = arith.extui %28 : i1 to i32
    %c0_i32_51 = arith.constant 0 : i32
    %c1_i32_52 = arith.constant 1 : i32
    %c2_i32_53 = arith.constant 2 : i32
    %c3_i32_54 = arith.constant 3 : i32
    %c4_i32_55 = arith.constant 4 : i32
    %c5_i32_56 = arith.constant 5 : i32
    %c6_i32_57 = arith.constant 6 : i32
    %c7_i32_58 = arith.constant 7 : i32
    %c0_i32_59 = arith.constant 0 : i32
    %102 = arith.cmpi ne, %101, %c0_i32_59 : i32
    scf.if %102 {
      %c0_i32_91 = arith.constant 0 : i32
      %c0_i32_92 = arith.constant 0 : i32
      %176 = tpu.memref_slice %arg8[%c0_i32_91, %c0_i32_92] : memref<8x10xf32, #tpu.memory_space<vmem>> -> memref<1x10xf32, #tpu.memory_space<vmem>>
      %c0_i32_93 = arith.constant 0 : i32
      %177 = tpu.memref_slice %arg6[%0, %c0_i32_93] : memref<16x10xf32, #tpu.memory_space<any>> -> memref<1x10xf32, #tpu.memory_space<any>>
      %178 = tpu.memref_slice %arg9[%c0_i32_51] : memref<8x!tpu.dma_semaphore, #tpu.memory_space<semaphore_mem>> -> memref<1x!tpu.dma_semaphore, #tpu.memory_space<semaphore_mem>>
      %179 = tpu.memref_squeeze %178 : memref<1x!tpu.dma_semaphore, #tpu.memory_space<semaphore_mem>> -> memref<!tpu.dma_semaphore, #tpu.memory_space<semaphore_mem>>
      tpu.enqueue_dma source(%176 : memref<1x10xf32, #tpu.memory_space<vmem>>) target(%177 : memref<1x10xf32, #tpu.memory_space<any>>) target_semaphore(%179 : memref<!tpu.dma_semaphore, #tpu.memory_space<semaphore_mem>>)
      %c1_i32_94 = arith.constant 1 : i32
      %c0_i32_95 = arith.constant 0 : i32
      %180 = tpu.memref_slice %arg8[%c1_i32_94, %c0_i32_95] : memref<8x10xf32, #tpu.memory_space<vmem>> -> memref<1x10xf32, #tpu.memory_space<vmem>>
      %c0_i32_96 = arith.constant 0 : i32
      %181 = tpu.memref_slice %arg6[%1, %c0_i32_96] : memref<16x10xf32, #tpu.memory_space<any>> -> memref<1x10xf32, #tpu.memory_space<any>>
      %182 = tpu.memref_slice %arg9[%c1_i32_52] : memref<8x!tpu.dma_semaphore, #tpu.memory_space<semaphore_mem>> -> memref<1x!tpu.dma_semaphore, #tpu.memory_space<semaphore_mem>>
      %183 = tpu.memref_squeeze %182 : memref<1x!tpu.dma_semaphore, #tpu.memory_space<semaphore_mem>> -> memref<!tpu.dma_semaphore, #tpu.memory_space<semaphore_mem>>
      tpu.enqueue_dma source(%180 : memref<1x10xf32, #tpu.memory_space<vmem>>) target(%181 : memref<1x10xf32, #tpu.memory_space<any>>) target_semaphore(%183 : memref<!tpu.dma_semaphore, #tpu.memory_space<semaphore_mem>>)
      %c2_i32_97 = arith.constant 2 : i32
      %c0_i32_98 = arith.constant 0 : i32
      %184 = tpu.memref_slice %arg8[%c2_i32_97, %c0_i32_98] : memref<8x10xf32, #tpu.memory_space<vmem>> -> memref<1x10xf32, #tpu.memory_space<vmem>>
      %c0_i32_99 = arith.constant 0 : i32
      %185 = tpu.memref_slice %arg6[%2, %c0_i32_99] : memref<16x10xf32, #tpu.memory_space<any>> -> memref<1x10xf32, #tpu.memory_space<any>>
      %186 = tpu.memref_slice %arg9[%c2_i32_53] : memref<8x!tpu.dma_semaphore, #tpu.memory_space<semaphore_mem>> -> memref<1x!tpu.dma_semaphore, #tpu.memory_space<semaphore_mem>>
      %187 = tpu.memref_squeeze %186 : memref<1x!tpu.dma_semaphore, #tpu.memory_space<semaphore_mem>> -> memref<!tpu.dma_semaphore, #tpu.memory_space<semaphore_mem>>
      tpu.enqueue_dma source(%184 : memref<1x10xf32, #tpu.memory_space<vmem>>) target(%185 : memref<1x10xf32, #tpu.memory_space<any>>) target_semaphore(%187 : memref<!tpu.dma_semaphore, #tpu.memory_space<semaphore_mem>>)
      %c3_i32_100 = arith.constant 3 : i32
      %c0_i32_101 = arith.constant 0 : i32
      %188 = tpu.memref_slice %arg8[%c3_i32_100, %c0_i32_101] : memref<8x10xf32, #tpu.memory_space<vmem>> -> memref<1x10xf32, #tpu.memory_space<vmem>>
      %c0_i32_102 = arith.constant 0 : i32
      %189 = tpu.memref_slice %arg6[%3, %c0_i32_102] : memref<16x10xf32, #tpu.memory_space<any>> -> memref<1x10xf32, #tpu.memory_space<any>>
      %190 = tpu.memref_slice %arg9[%c3_i32_54] : memref<8x!tpu.dma_semaphore, #tpu.memory_space<semaphore_mem>> -> memref<1x!tpu.dma_semaphore, #tpu.memory_space<semaphore_mem>>
      %191 = tpu.memref_squeeze %190 : memref<1x!tpu.dma_semaphore, #tpu.memory_space<semaphore_mem>> -> memref<!tpu.dma_semaphore, #tpu.memory_space<semaphore_mem>>
      tpu.enqueue_dma source(%188 : memref<1x10xf32, #tpu.memory_space<vmem>>) target(%189 : memref<1x10xf32, #tpu.memory_space<any>>) target_semaphore(%191 : memref<!tpu.dma_semaphore, #tpu.memory_space<semaphore_mem>>)
      %c4_i32_103 = arith.constant 4 : i32
      %c0_i32_104 = arith.constant 0 : i32
      %192 = tpu.memref_slice %arg8[%c4_i32_103, %c0_i32_104] : memref<8x10xf32, #tpu.memory_space<vmem>> -> memref<1x10xf32, #tpu.memory_space<vmem>>
      %c0_i32_105 = arith.constant 0 : i32
      %193 = tpu.memref_slice %arg6[%4, %c0_i32_105] : memref<16x10xf32, #tpu.memory_space<any>> -> memref<1x10xf32, #tpu.memory_space<any>>
      %194 = tpu.memref_slice %arg9[%c4_i32_55] : memref<8x!tpu.dma_semaphore, #tpu.memory_space<semaphore_mem>> -> memref<1x!tpu.dma_semaphore, #tpu.memory_space<semaphore_mem>>
      %195 = tpu.memref_squeeze %194 : memref<1x!tpu.dma_semaphore, #tpu.memory_space<semaphore_mem>> -> memref<!tpu.dma_semaphore, #tpu.memory_space<semaphore_mem>>
      tpu.enqueue_dma source(%192 : memref<1x10xf32, #tpu.memory_space<vmem>>) target(%193 : memref<1x10xf32, #tpu.memory_space<any>>) target_semaphore(%195 : memref<!tpu.dma_semaphore, #tpu.memory_space<semaphore_mem>>)
      %c5_i32_106 = arith.constant 5 : i32
      %c0_i32_107 = arith.constant 0 : i32
      %196 = tpu.memref_slice %arg8[%c5_i32_106, %c0_i32_107] : memref<8x10xf32, #tpu.memory_space<vmem>> -> memref<1x10xf32, #tpu.memory_space<vmem>>
      %c0_i32_108 = arith.constant 0 : i32
      %197 = tpu.memref_slice %arg6[%5, %c0_i32_108] : memref<16x10xf32, #tpu.memory_space<any>> -> memref<1x10xf32, #tpu.memory_space<any>>
      %198 = tpu.memref_slice %arg9[%c5_i32_56] : memref<8x!tpu.dma_semaphore, #tpu.memory_space<semaphore_mem>> -> memref<1x!tpu.dma_semaphore, #tpu.memory_space<semaphore_mem>>
      %199 = tpu.memref_squeeze %198 : memref<1x!tpu.dma_semaphore, #tpu.memory_space<semaphore_mem>> -> memref<!tpu.dma_semaphore, #tpu.memory_space<semaphore_mem>>
      tpu.enqueue_dma source(%196 : memref<1x10xf32, #tpu.memory_space<vmem>>) target(%197 : memref<1x10xf32, #tpu.memory_space<any>>) target_semaphore(%199 : memref<!tpu.dma_semaphore, #tpu.memory_space<semaphore_mem>>)
      %c6_i32_109 = arith.constant 6 : i32
      %c0_i32_110 = arith.constant 0 : i32
      %200 = tpu.memref_slice %arg8[%c6_i32_109, %c0_i32_110] : memref<8x10xf32, #tpu.memory_space<vmem>> -> memref<1x10xf32, #tpu.memory_space<vmem>>
      %c0_i32_111 = arith.constant 0 : i32
      %201 = tpu.memref_slice %arg6[%6, %c0_i32_111] : memref<16x10xf32, #tpu.memory_space<any>> -> memref<1x10xf32, #tpu.memory_space<any>>
      %202 = tpu.memref_slice %arg9[%c6_i32_57] : memref<8x!tpu.dma_semaphore, #tpu.memory_space<semaphore_mem>> -> memref<1x!tpu.dma_semaphore, #tpu.memory_space<semaphore_mem>>
      %203 = tpu.memref_squeeze %202 : memref<1x!tpu.dma_semaphore, #tpu.memory_space<semaphore_mem>> -> memref<!tpu.dma_semaphore, #tpu.memory_space<semaphore_mem>>
      tpu.enqueue_dma source(%200 : memref<1x10xf32, #tpu.memory_space<vmem>>) target(%201 : memref<1x10xf32, #tpu.memory_space<any>>) target_semaphore(%203 : memref<!tpu.dma_semaphore, #tpu.memory_space<semaphore_mem>>)
      %c7_i32_112 = arith.constant 7 : i32
      %c0_i32_113 = arith.constant 0 : i32
      %204 = tpu.memref_slice %arg8[%c7_i32_112, %c0_i32_113] : memref<8x10xf32, #tpu.memory_space<vmem>> -> memref<1x10xf32, #tpu.memory_space<vmem>>
      %c0_i32_114 = arith.constant 0 : i32
      %205 = tpu.memref_slice %arg6[%7, %c0_i32_114] : memref<16x10xf32, #tpu.memory_space<any>> -> memref<1x10xf32, #tpu.memory_space<any>>
      %206 = tpu.memref_slice %arg9[%c7_i32_58] : memref<8x!tpu.dma_semaphore, #tpu.memory_space<semaphore_mem>> -> memref<1x!tpu.dma_semaphore, #tpu.memory_space<semaphore_mem>>
      %207 = tpu.memref_squeeze %206 : memref<1x!tpu.dma_semaphore, #tpu.memory_space<semaphore_mem>> -> memref<!tpu.dma_semaphore, #tpu.memory_space<semaphore_mem>>
      tpu.enqueue_dma source(%204 : memref<1x10xf32, #tpu.memory_space<vmem>>) target(%205 : memref<1x10xf32, #tpu.memory_space<any>>) target_semaphore(%207 : memref<!tpu.dma_semaphore, #tpu.memory_space<semaphore_mem>>)
    } else {
    }
    %103 = arith.mulf %97, %64 : vector<8x10xf32>
    %cst_60 = arith.constant dense<0.000000e+00> : vector<8xf32>
    %104 = vector.multi_reduction <add>, %103, %cst_60 [1] : vector<8x10xf32> to vector<8xf32>
    %105 = vector.shape_cast %104 : vector<8xf32> to vector<8x1xf32>
    %106 = arith.mulf %97, %45 : vector<8x10xf32>
    %cst_61 = arith.constant dense<0.000000e+00> : vector<8xf32>
    %107 = vector.multi_reduction <add>, %106, %cst_61 [1] : vector<8x10xf32> to vector<8xf32>
    %108 = vector.shape_cast %107 : vector<8xf32> to vector<8x1xf32>
    %cst_62 = arith.constant 1.000000e+00 : f32
    %109 = vector.broadcast %cst_62 : f32 to vector<8x1xf32>
    %110 = arith.subf %109, %105 : vector<8x1xf32>
    %cst_63 = arith.constant 1.000000e+00 : f32
    %111 = vector.broadcast %cst_63 : f32 to vector<8x1xf32>
    %112 = arith.divf %111, %110 : vector<8x1xf32>
    %113 = arith.subf %71, %50 : vector<8x1xf32>
    %cst_64 = arith.constant 3.000000e+00 : f32
    %114 = vector.broadcast %cst_64 : f32 to vector<8x1xf32>
    %115 = arith.mulf %114, %71 : vector<8x1xf32>
    %116 = arith.mulf %115, %112 : vector<8x1xf32>
    %117 = arith.mulf %108, %71 : vector<8x1xf32>
    %118 = arith.subf %105, %117 : vector<8x1xf32>
    %119 = arith.mulf %116, %118 : vector<8x1xf32>
    %120 = arith.addf %113, %119 : vector<8x1xf32>
    %121 = math.absf %120 : vector<8x1xf32>
    %cst_65 = arith.constant dense<0.000000e+00> : vector<1xf32>
    %122 = vector.multi_reduction <add>, %121, %cst_65 [0] : vector<8x1xf32> to vector<1xf32>
    %123 = vector.shape_cast %122 : vector<1xf32> to vector<1x1xf32>
    %cst_66 = arith.constant 1.250000e-01 : f32
    %124 = vector.broadcast %cst_66 : f32 to vector<1x1xf32>
    %125 = arith.mulf %123, %124 : vector<1x1xf32>
    %126 = arith.mulf %121, %34 : vector<8x1xf32>
    %cst_67 = arith.constant dense<0.000000e+00> : vector<1xf32>
    %127 = vector.multi_reduction <add>, %126, %cst_67 [0] : vector<8x1xf32> to vector<1xf32>
    %128 = vector.shape_cast %127 : vector<1xf32> to vector<1x1xf32>
    %129 = arith.mulf %121, %121 : vector<8x1xf32>
    %cst_68 = arith.constant dense<0.000000e+00> : vector<1xf32>
    %130 = vector.multi_reduction <add>, %129, %cst_68 [0] : vector<8x1xf32> to vector<1xf32>
    %131 = vector.shape_cast %130 : vector<1xf32> to vector<1x1xf32>
    %132 = math.sqrt %131 : vector<1x1xf32>
    %133 = arith.mulf %132, %87 : vector<1x1xf32>
    %cst_69 = arith.constant 9.99999993E-9 : f32
    %134 = vector.broadcast %cst_69 : f32 to vector<1x1xf32>
    %135 = arith.maximumf %133, %134 : vector<1x1xf32>
    %136 = arith.divf %128, %135 : vector<1x1xf32>
    %137 = math.absf %125 : vector<1x1xf32>
    %cst_70 = arith.constant 2.82842708 : f32
    %138 = vector.broadcast %cst_70 : f32 to vector<1x1xf32>
    %139 = arith.mulf %137, %138 : vector<1x1xf32>
    %140 = arith.mulf %125, %83 : vector<1x1xf32>
    %141 = arith.mulf %139, %87 : vector<1x1xf32>
    %cst_71 = arith.constant 9.99999993E-9 : f32
    %142 = vector.broadcast %cst_71 : f32 to vector<1x1xf32>
    %143 = arith.maximumf %141, %142 : vector<1x1xf32>
    %144 = arith.divf %140, %143 : vector<1x1xf32>
    %145 = arith.subf %136, %144 : vector<1x1xf32>
    %146 = arith.mulf %125, %83 : vector<1x1xf32>
    %147 = arith.subf %128, %146 : vector<1x1xf32>
    %cst_72 = arith.constant 1.000000e+00 : f32
    %148 = vector.broadcast %cst_72 : f32 to vector<8x1xf32>
    %149 = arith.subf %148, %105 : vector<8x1xf32>
    %150 = math.log %149 : vector<8x1xf32>
    %cst_73 = arith.constant dense<0.000000e+00> : vector<1xf32>
    %151 = vector.multi_reduction <add>, %150, %cst_73 [0] : vector<8x1xf32> to vector<1xf32>
    %152 = vector.shape_cast %151 : vector<1xf32> to vector<1x1xf32>
    %cst_74 = arith.constant 1.250000e-01 : f32
    %153 = vector.broadcast %cst_74 : f32 to vector<1x1xf32>
    %154 = arith.mulf %152, %153 : vector<1x1xf32>
    %cst_75 = arith.constant 3.000000e+00 : f32
    %155 = vector.broadcast %cst_75 : f32 to vector<1x1xf32>
    %156 = arith.mulf %155, %154 : vector<1x1xf32>
    %157 = arith.addf %81, %156 : vector<1x1xf32>
    %158 = tpu.iota {dimensions = array<i32: 1>} : vector<1x3xi32>
    %c0_i32_76 = arith.constant 0 : i32
    %159 = vector.broadcast %c0_i32_76 : i32 to vector<1x3xi32>
    %160 = arith.cmpi eq, %158, %159 : vector<1x3xi32>
    %c1_i32_77 = arith.constant 1 : i32
    %161 = vector.broadcast %c1_i32_77 : i32 to vector<1x3xi32>
    %162 = arith.cmpi eq, %158, %161 : vector<1x3xi32>
    %163 = vector.shape_cast %145 : vector<1x1xf32> to vector<1x1xf32>
    %164 = vector.broadcast %163 : vector<1x1xf32> to vector<1x3xf32>
    %165 = vector.shape_cast %147 : vector<1x1xf32> to vector<1x1xf32>
    %166 = vector.broadcast %165 : vector<1x1xf32> to vector<1x3xf32>
    %167 = arith.select %162, %164, %166 : vector<1x3xi1>, vector<1x3xf32>
    %168 = vector.shape_cast %157 : vector<1x1xf32> to vector<1x1xf32>
    %169 = vector.broadcast %168 : vector<1x1xf32> to vector<1x3xf32>
    %170 = arith.select %160, %169, %167 : vector<1x3xi1>, vector<1x3xf32>
    %c0_78 = arith.constant 0 : index
    %c0_79 = arith.constant 0 : index
    %171 = vector.load %arg7[%c0_78, %c0_79] : memref<1x3xf32, #tpu.memory_space<vmem>>, vector<1x3xf32>
    tpu.vector_store %arg7[%c0_78, %c0_79], %170 {strides = array<i32>} : memref<1x3xf32, #tpu.memory_space<vmem>>, vector<1x3xf32>,
    %172 = arith.extui %27 : i1 to i32
    %c0_i32_80 = arith.constant 0 : i32
    %c0_i32_81 = arith.constant 0 : i32
    %173 = arith.cmpi ne, %172, %c0_i32_81 : i32
    scf.if %173 {
      %c0_i32_91 = arith.constant 0 : i32
      %176 = tpu.memref_slice %arg6[%0, %c0_i32_91] : memref<16x10xf32, #tpu.memory_space<any>> -> memref<8x10xf32, #tpu.memory_space<any>>
      %177 = tpu.memref_slice %arg9[%c0_i32_80] : memref<8x!tpu.dma_semaphore, #tpu.memory_space<semaphore_mem>> -> memref<1x!tpu.dma_semaphore, #tpu.memory_space<semaphore_mem>>
      %178 = tpu.memref_squeeze %177 : memref<1x!tpu.dma_semaphore, #tpu.memory_space<semaphore_mem>> -> memref<!tpu.dma_semaphore, #tpu.memory_space<semaphore_mem>>
      tpu.wait_dma2 semaphore(%178 : memref<!tpu.dma_semaphore, #tpu.memory_space<semaphore_mem>>) src(%arg8 : memref<8x10xf32, #tpu.memory_space<vmem>>) dst(%176 : memref<8x10xf32, #tpu.memory_space<any>>)
    } else {
    }
    %174 = arith.extui %28 : i1 to i32
    %c0_i32_82 = arith.constant 0 : i32
    %c1_i32_83 = arith.constant 1 : i32
    %c2_i32_84 = arith.constant 2 : i32
    %c3_i32_85 = arith.constant 3 : i32
    %c4_i32_86 = arith.constant 4 : i32
    %c5_i32_87 = arith.constant 5 : i32
    %c6_i32_88 = arith.constant 6 : i32
    %c7_i32_89 = arith.constant 7 : i32
    %c0_i32_90 = arith.constant 0 : i32
    %175 = arith.cmpi ne, %174, %c0_i32_90 : i32
    scf.if %175 {
      %c0_i32_91 = arith.constant 0 : i32
      %c0_i32_92 = arith.constant 0 : i32
      %176 = tpu.memref_slice %arg8[%c0_i32_91, %c0_i32_92] : memref<8x10xf32, #tpu.memory_space<vmem>> -> memref<1x10xf32, #tpu.memory_space<vmem>>
      %c0_i32_93 = arith.constant 0 : i32
      %177 = tpu.memref_slice %arg6[%0, %c0_i32_93] : memref<16x10xf32, #tpu.memory_space<any>> -> memref<1x10xf32, #tpu.memory_space<any>>
      %178 = tpu.memref_slice %arg9[%c0_i32_82] : memref<8x!tpu.dma_semaphore, #tpu.memory_space<semaphore_mem>> -> memref<1x!tpu.dma_semaphore, #tpu.memory_space<semaphore_mem>>
      %179 = tpu.memref_squeeze %178 : memref<1x!tpu.dma_semaphore, #tpu.memory_space<semaphore_mem>> -> memref<!tpu.dma_semaphore, #tpu.memory_space<semaphore_mem>>
      tpu.wait_dma2 semaphore(%179 : memref<!tpu.dma_semaphore, #tpu.memory_space<semaphore_mem>>) src(%176 : memref<1x10xf32, #tpu.memory_space<vmem>>) dst(%177 : memref<1x10xf32, #tpu.memory_space<any>>)
      %c1_i32_94 = arith.constant 1 : i32
      %c0_i32_95 = arith.constant 0 : i32
      %180 = tpu.memref_slice %arg8[%c1_i32_94, %c0_i32_95] : memref<8x10xf32, #tpu.memory_space<vmem>> -> memref<1x10xf32, #tpu.memory_space<vmem>>
      %c0_i32_96 = arith.constant 0 : i32
      %181 = tpu.memref_slice %arg6[%1, %c0_i32_96] : memref<16x10xf32, #tpu.memory_space<any>> -> memref<1x10xf32, #tpu.memory_space<any>>
      %182 = tpu.memref_slice %arg9[%c1_i32_83] : memref<8x!tpu.dma_semaphore, #tpu.memory_space<semaphore_mem>> -> memref<1x!tpu.dma_semaphore, #tpu.memory_space<semaphore_mem>>
      %183 = tpu.memref_squeeze %182 : memref<1x!tpu.dma_semaphore, #tpu.memory_space<semaphore_mem>> -> memref<!tpu.dma_semaphore, #tpu.memory_space<semaphore_mem>>
      tpu.wait_dma2 semaphore(%183 : memref<!tpu.dma_semaphore, #tpu.memory_space<semaphore_mem>>) src(%180 : memref<1x10xf32, #tpu.memory_space<vmem>>) dst(%181 : memref<1x10xf32, #tpu.memory_space<any>>)
      %c2_i32_97 = arith.constant 2 : i32
      %c0_i32_98 = arith.constant 0 : i32
      %184 = tpu.memref_slice %arg8[%c2_i32_97, %c0_i32_98] : memref<8x10xf32, #tpu.memory_space<vmem>> -> memref<1x10xf32, #tpu.memory_space<vmem>>
      %c0_i32_99 = arith.constant 0 : i32
      %185 = tpu.memref_slice %arg6[%2, %c0_i32_99] : memref<16x10xf32, #tpu.memory_space<any>> -> memref<1x10xf32, #tpu.memory_space<any>>
      %186 = tpu.memref_slice %arg9[%c2_i32_84] : memref<8x!tpu.dma_semaphore, #tpu.memory_space<semaphore_mem>> -> memref<1x!tpu.dma_semaphore, #tpu.memory_space<semaphore_mem>>
      %187 = tpu.memref_squeeze %186 : memref<1x!tpu.dma_semaphore, #tpu.memory_space<semaphore_mem>> -> memref<!tpu.dma_semaphore, #tpu.memory_space<semaphore_mem>>
      tpu.wait_dma2 semaphore(%187 : memref<!tpu.dma_semaphore, #tpu.memory_space<semaphore_mem>>) src(%184 : memref<1x10xf32, #tpu.memory_space<vmem>>) dst(%185 : memref<1x10xf32, #tpu.memory_space<any>>)
      %c3_i32_100 = arith.constant 3 : i32
      %c0_i32_101 = arith.constant 0 : i32
      %188 = tpu.memref_slice %arg8[%c3_i32_100, %c0_i32_101] : memref<8x10xf32, #tpu.memory_space<vmem>> -> memref<1x10xf32, #tpu.memory_space<vmem>>
      %c0_i32_102 = arith.constant 0 : i32
      %189 = tpu.memref_slice %arg6[%3, %c0_i32_102] : memref<16x10xf32, #tpu.memory_space<any>> -> memref<1x10xf32, #tpu.memory_space<any>>
      %190 = tpu.memref_slice %arg9[%c3_i32_85] : memref<8x!tpu.dma_semaphore, #tpu.memory_space<semaphore_mem>> -> memref<1x!tpu.dma_semaphore, #tpu.memory_space<semaphore_mem>>
      %191 = tpu.memref_squeeze %190 : memref<1x!tpu.dma_semaphore, #tpu.memory_space<semaphore_mem>> -> memref<!tpu.dma_semaphore, #tpu.memory_space<semaphore_mem>>
      tpu.wait_dma2 semaphore(%191 : memref<!tpu.dma_semaphore, #tpu.memory_space<semaphore_mem>>) src(%188 : memref<1x10xf32, #tpu.memory_space<vmem>>) dst(%189 : memref<1x10xf32, #tpu.memory_space<any>>)
      %c4_i32_103 = arith.constant 4 : i32
      %c0_i32_104 = arith.constant 0 : i32
      %192 = tpu.memref_slice %arg8[%c4_i32_103, %c0_i32_104] : memref<8x10xf32, #tpu.memory_space<vmem>> -> memref<1x10xf32, #tpu.memory_space<vmem>>
      %c0_i32_105 = arith.constant 0 : i32
      %193 = tpu.memref_slice %arg6[%4, %c0_i32_105] : memref<16x10xf32, #tpu.memory_space<any>> -> memref<1x10xf32, #tpu.memory_space<any>>
      %194 = tpu.memref_slice %arg9[%c4_i32_86] : memref<8x!tpu.dma_semaphore, #tpu.memory_space<semaphore_mem>> -> memref<1x!tpu.dma_semaphore, #tpu.memory_space<semaphore_mem>>
      %195 = tpu.memref_squeeze %194 : memref<1x!tpu.dma_semaphore, #tpu.memory_space<semaphore_mem>> -> memref<!tpu.dma_semaphore, #tpu.memory_space<semaphore_mem>>
      tpu.wait_dma2 semaphore(%195 : memref<!tpu.dma_semaphore, #tpu.memory_space<semaphore_mem>>) src(%192 : memref<1x10xf32, #tpu.memory_space<vmem>>) dst(%193 : memref<1x10xf32, #tpu.memory_space<any>>)
      %c5_i32_106 = arith.constant 5 : i32
      %c0_i32_107 = arith.constant 0 : i32
      %196 = tpu.memref_slice %arg8[%c5_i32_106, %c0_i32_107] : memref<8x10xf32, #tpu.memory_space<vmem>> -> memref<1x10xf32, #tpu.memory_space<vmem>>
      %c0_i32_108 = arith.constant 0 : i32
      %197 = tpu.memref_slice %arg6[%5, %c0_i32_108] : memref<16x10xf32, #tpu.memory_space<any>> -> memref<1x10xf32, #tpu.memory_space<any>>
      %198 = tpu.memref_slice %arg9[%c5_i32_87] : memref<8x!tpu.dma_semaphore, #tpu.memory_space<semaphore_mem>> -> memref<1x!tpu.dma_semaphore, #tpu.memory_space<semaphore_mem>>
      %199 = tpu.memref_squeeze %198 : memref<1x!tpu.dma_semaphore, #tpu.memory_space<semaphore_mem>> -> memref<!tpu.dma_semaphore, #tpu.memory_space<semaphore_mem>>
      tpu.wait_dma2 semaphore(%199 : memref<!tpu.dma_semaphore, #tpu.memory_space<semaphore_mem>>) src(%196 : memref<1x10xf32, #tpu.memory_space<vmem>>) dst(%197 : memref<1x10xf32, #tpu.memory_space<any>>)
      %c6_i32_109 = arith.constant 6 : i32
      %c0_i32_110 = arith.constant 0 : i32
      %200 = tpu.memref_slice %arg8[%c6_i32_109, %c0_i32_110] : memref<8x10xf32, #tpu.memory_space<vmem>> -> memref<1x10xf32, #tpu.memory_space<vmem>>
      %c0_i32_111 = arith.constant 0 : i32
      %201 = tpu.memref_slice %arg6[%6, %c0_i32_111] : memref<16x10xf32, #tpu.memory_space<any>> -> memref<1x10xf32, #tpu.memory_space<any>>
      %202 = tpu.memref_slice %arg9[%c6_i32_88] : memref<8x!tpu.dma_semaphore, #tpu.memory_space<semaphore_mem>> -> memref<1x!tpu.dma_semaphore, #tpu.memory_space<semaphore_mem>>
      %203 = tpu.memref_squeeze %202 : memref<1x!tpu.dma_semaphore, #tpu.memory_space<semaphore_mem>> -> memref<!tpu.dma_semaphore, #tpu.memory_space<semaphore_mem>>
      tpu.wait_dma2 semaphore(%203 : memref<!tpu.dma_semaphore, #tpu.memory_space<semaphore_mem>>) src(%200 : memref<1x10xf32, #tpu.memory_space<vmem>>) dst(%201 : memref<1x10xf32, #tpu.memory_space<any>>)
      %c7_i32_112 = arith.constant 7 : i32
      %c0_i32_113 = arith.constant 0 : i32
      %204 = tpu.memref_slice %arg8[%c7_i32_112, %c0_i32_113] : memref<8x10xf32, #tpu.memory_space<vmem>> -> memref<1x10xf32, #tpu.memory_space<vmem>>
      %c0_i32_114 = arith.constant 0 : i32
      %205 = tpu.memref_slice %arg6[%7, %c0_i32_114] : memref<16x10xf32, #tpu.memory_space<any>> -> memref<1x10xf32, #tpu.memory_space<any>>
      %206 = tpu.memref_slice %arg9[%c7_i32_89] : memref<8x!tpu.dma_semaphore, #tpu.memory_space<semaphore_mem>> -> memref<1x!tpu.dma_semaphore, #tpu.memory_space<semaphore_mem>>
      %207 = tpu.memref_squeeze %206 : memref<1x!tpu.dma_semaphore, #tpu.memory_space<semaphore_mem>> -> memref<!tpu.dma_semaphore, #tpu.memory_space<semaphore_mem>>
      tpu.wait_dma2 semaphore(%207 : memref<!tpu.dma_semaphore, #tpu.memory_space<semaphore_mem>>) src(%204 : memref<1x10xf32, #tpu.memory_space<vmem>>) dst(%205 : memref<1x10xf32, #tpu.memory_space<any>>)
    } else {
    }
    return
  }
}

</mosaic_0001>

<llo_original>
// kernel: _elr_forward_impl.1
$region0: #{_elr_forward_impl.1}
  #allocation0 [shape = 'u32[]', space=smem, size = 0x4, offset = 0x4, fixed_abs, tag = 'smem constant byte address 0x4 - core index']
  #allocation1 [shape = 'u32[144,128]{1,0:T(1,128)}', space=vmem, size = 0x12000, scoped, tag = 'internal scratch']
  #allocation2 [shape = 'f32[8,10]{1,0:T(8,128)}', space=vmem, size = 0x1000, scoped, tag = 'scratch operand']
  #allocation3 [shape = 's32[8]{0}', space=sflag, size = 0x20, scoped, tag = 'scratch operand']
  #allocation6 [shape = 's32[]', space=sflag, size = 0x4, offset = 0, fixed_abs, tag = 'sflag constant byte address 0x0 - dummy sync flag']
  #allocation7 [shape = 's32[]', space=sflag, size = 0x4, offset = 0, fixed_abs, tag = 'sflag constant byte address 0x0 - dummy sync flag']
  #allocation8 [shape = 's32[]', space=sflag, size = 0x4, offset = 0, fixed_abs, tag = 'sflag constant byte address 0x0 - dummy sync flag']
  #allocation9 [shape = 's32[]', space=sflag, size = 0x4, offset = 0, fixed_abs, tag = 'sflag constant byte address 0x0 - dummy sync flag']
  #allocation10 [shape = 's32[]', space=sflag, size = 0x4, offset = 0, fixed_abs, tag = 'sflag constant byte address 0x0 - dummy sync flag']
  #allocation11 [shape = 's32[]', space=sflag, size = 0x4, offset = 0, fixed_abs, tag = 'sflag constant byte address 0x0 - dummy sync flag']
  #allocation12 [shape = 's32[]', space=sflag, size = 0x4, offset = 0, fixed_abs, tag = 'sflag constant byte address 0x0 - dummy sync flag']
  #allocation13 [shape = 's32[]', space=sflag, size = 0x4, offset = 0, fixed_abs, tag = 'sflag constant byte address 0x0 - dummy sync flag']
  #allocation14 [shape = 's32[]', space=sflag, size = 0x4, offset = 0, fixed_abs, tag = 'sflag constant byte address 0x0 - dummy sync flag']
  #allocation15 [shape = 's32[]', space=sflag, size = 0x4, offset = 0, fixed_abs, tag = 'sflag constant byte address 0x0 - dummy sync flag']
  #allocation16 [shape = 's32[]', space=sflag, size = 0x4, offset = 0, fixed_abs, tag = 'sflag constant byte address 0x0 - dummy sync flag']
  #allocation17 [shape = 's32[]', space=sflag, size = 0x4, offset = 0, fixed_abs, tag = 'sflag constant byte address 0x0 - dummy sync flag']
  #allocation18 [shape = 's32[]', space=sflag, size = 0x4, offset = 0, fixed_abs, tag = 'sflag constant byte address 0x0 - dummy sync flag']
  #allocation19 [shape = 's32[]', space=sflag, size = 0x4, offset = 0, fixed_abs, tag = 'sflag constant byte address 0x0 - dummy sync flag']
  #allocation20 [shape = 's32[]', space=sflag, size = 0x4, offset = 0, fixed_abs, tag = 'sflag constant byte address 0x0 - dummy sync flag']
  #allocation21 [shape = 's32[]', space=sflag, size = 0x4, offset = 0, fixed_abs, tag = 'sflag constant byte address 0x0 - dummy sync flag']
  #allocation22 [shape = 's32[]', space=sflag, size = 0x4, offset = 0, fixed_abs, tag = 'sflag constant byte address 0x0 - dummy sync flag']
  #allocation23 [shape = 's32[]', space=sflag, size = 0x4, offset = 0, fixed_abs, tag = 'sflag constant byte address 0x0 - dummy sync flag']
  %s0 = inlined_call_operand.vmem [shape: s32[8], index: 0, kind: input, shape index: {}]
  %s1 = inlined_call_operand.vmem [shape: s32[8,1], index: 1, kind: input, shape index: {}]
  %s2 = inlined_call_operand.vmem [shape: s32[8,1], index: 2, kind: input, shape index: {}]
  %s3 = inlined_call_operand.vmem [shape: f32[8,10], index: 3, kind: input, shape index: {}]
  %s4 = inlined_call_operand.vmem [shape: f32[8,1], index: 4, kind: input, shape index: {}]
  %s5 = inlined_call_operand.vmem [shape: f32[16,10], index: 5, kind: input, shape index: {}, may-alias: {5,6}]
  %s6 = inlined_call_operand.vmem [shape: f32[16,10], index: 6, kind: output, shape index: {0}, may-alias: {5,6}]
  %s7 = inlined_call_operand.vmem [shape: f32[1,3], index: 7, kind: output, shape index: {1}]
  %8 = xla_tuple %s6, %s7
  %s9 = sld [smem:[#allocation0]]
  $region614: #{_elr_forward_impl.1} parent=0
    _
  %s11 = ssub.s32 1, %s9
  %s12 = scalar_select 0, %s11, %s9
  $region1: #{_elr_forward_impl.1} parent=0
    #allocation4 [shape = 'u8[512]{0}', space=smem, size = 0x200, scoped, tag = 'input window, operand 0, single buffered']
    #allocation5 [shape = 's32[1]{0}', space=sflag, size = 0x4, scoped, tag = 'scoped memory for _elr_forward_impl.1']
    %13 = vsyncpa [#allocation5], 0
    // Predicated region
    $region2: #{_elr_forward_impl.1} parent=1 // pred_check
      _
    $region3: #{_elr_forward_impl.1} parent=1 // pred_check_branch
      %15 = sbr.rel (0) target = $region5
    $region4: #{_elr_forward_impl.1} parent=1 // pred_region
      %s17 = ssub.s32 16, 16
      %18 = vsyncadd [#allocation5], %s17
      %s20 = sshll.u32 %s0, 4
      %s21 = int_to_ptr.vmem [resolvable:$true] %s20
      %23 = dma.vmem_to_smem %s21, 16, [#allocation4], [#allocation5]
    $region5: #{_elr_forward_impl.1} parent=1 // pred_fallthru
      _
    // Predicated region
    $region6: #{_elr_forward_impl.1} parent=1 // pred_check
      _
    $region7: #{_elr_forward_impl.1} parent=1 // pred_check_branch
      %25 = sbr.rel (0) target = $region9
    $region8: #{_elr_forward_impl.1} parent=1 // pred_region
      _
    $region9: #{_elr_forward_impl.1} parent=1 // pred_fallthru
      _
    // Predicated region
    $region10: #{_elr_forward_impl.1} parent=1 // pred_check
      _
    $region11: #{_elr_forward_impl.1} parent=1 // pred_check_branch
      %27 = sbr.rel (0) target = $region13
    $region12: #{_elr_forward_impl.1} parent=1 // pred_region
      _
    $region13: #{_elr_forward_impl.1} parent=1 // pred_fallthru
      _
    // Predicated region
    $region14: #{_elr_forward_impl.1} parent=1 // pred_check
      _
    $region15: #{_elr_forward_impl.1} parent=1 // pred_check_branch
      %29 = sbr.rel (0) target = $region17
    $region16: #{_elr_forward_impl.1} parent=1 // pred_region
      _
    $region17: #{_elr_forward_impl.1} parent=1 // pred_fallthru
      _
    // Predicated region
    $region18: #{_elr_forward_impl.1} parent=1 // pred_check
      _
    $region19: #{_elr_forward_impl.1} parent=1 // pred_check_branch
      %31 = sbr.rel (0) target = $region21
    $region20: #{_elr_forward_impl.1} parent=1 // pred_region
      _
    $region21: #{_elr_forward_impl.1} parent=1 // pred_fallthru
      _
    // Predicated region
    $region22: #{_elr_forward_impl.1} parent=1 // pred_check
      _
    $region23: #{_elr_forward_impl.1} parent=1 // pred_check_branch
      %33 = sbr.rel (0) target = $region25
    $region24: #{_elr_forward_impl.1} parent=1 // pred_region
      %34 = dma.done [#allocation5], 16
    $region25: #{_elr_forward_impl.1} parent=1 // pred_fallthru
      _
    %35 = sfence
    %s36 = sld [smem:[#allocation4]]
    %s37 = sld [smem:[#allocation4 + $0x1]]
    %s38 = sld [smem:[#allocation4 + $0x2]]
    %s39 = sld [smem:[#allocation4 + $0x3]]
    %s40 = sld [smem:[#allocation4 + $0x4]]
    %s41 = sld [smem:[#allocation4 + $0x5]]
    %s42 = sld [smem:[#allocation4 + $0x6]]
    %s43 = sld [smem:[#allocation4 + $0x7]]
    %s44 = sadd.s32 %s36, 7
    %p45 = scmp.eq.s32.totalorder %s43, %s44
    %s46 = sadd.s32 %s36, 1
    %p47 = scmp.eq.s32.totalorder %s37, %s46
    %p48 = pnand %p45, %p47
    %p49 = pneg %p48
    %s50 = sadd.s32 %s36, 2
    %p51 = scmp.eq.s32.totalorder %s38, %s50
    %p52 = pnand %p49, %p51
    %p53 = pneg %p52
    %s54 = sadd.s32 %s36, 3
    %p55 = scmp.eq.s32.totalorder %s39, %s54
    %p56 = pnand %p53, %p55
    %p57 = pneg %p56
    %s58 = sadd.s32 %s36, 4
    %p59 = scmp.eq.s32.totalorder %s40, %s58
    %p60 = pnand %p57, %p59
    %p61 = pneg %p60
    %s62 = sadd.s32 %s36, 5
    %p63 = scmp.eq.s32.totalorder %s41, %s62
    %p64 = pnand %p61, %p63
    %p65 = pneg %p64
    %s66 = sadd.s32 %s36, 6
    %p67 = scmp.eq.s32.totalorder %s42, %s66
    %p68 = pnand %p65, %p67
    %p69 = pneg %p68
    // Predicated region
    $region26: #{_elr_forward_impl.1} parent=1 // pred_check
      _
    $region27: #{_elr_forward_impl.1} parent=1 // pred_check_branch
      %71 = sbr.rel (%p68) target = $region29
    $region28: #{_elr_forward_impl.1} parent=1 // pred_region
      %s72 = scalar_lea.vmem %s5, %s36
      %p74 = scmp.lt.u32.totalorder 8, 8
      %p75 = pneg %p74
      // Predicated region
      $region30: #{_elr_forward_impl.1} parent=28 // pred_check
        _
      $region31: #{_elr_forward_impl.1} parent=28 // pred_check_branch
        %77 = sbr.rel (%p74) target = $region33
      $region32: #{_elr_forward_impl.1} parent=28 // pred_region
        %s93 = sand.u32 8, 7
        %p94 = scmp.eq.s32.totalorder %s93, 0
        // Predicated region
        $region45: #{_elr_forward_impl.1} parent=32 // pred_check
          %p95 = pneg %p94
        $region46: #{_elr_forward_impl.1} parent=32 // pred_check_branch
          %97 = sbr.rel (%p95) target = $region48
        $region47: #{_elr_forward_impl.1} parent=32 // pred_region
          loop: start=0, step=1, limit=1
          $region49: #{_elr_forward_impl.1} parent=47 // loop_pre_header
            _
          $region50: #{_elr_forward_impl.1} parent=47 // loop_header
            %s99 = sphi 0, %s103
            %p100 = scmp.ge.s32.totalorder %s99, 1
            %s104 = sphi %s72, %s72
            %s105 = sphi [#allocation2], [#allocation2]
          $region51: #{_elr_forward_impl.1} parent=47 // loop_header_branch
            %102 = sbr.rel (%p100) target = $region55
          $region52: #{_elr_forward_impl.1} parent=47 // loop_body
            %v106 = vld [vmem:[%s104] sm:$0xff]
            %107 = vst [vmem:[%s105] sm:$0xff] %v106
          $region53: #{_elr_forward_impl.1} parent=47 // loop_footer
            %s103 = sadd.s32 1, %s99
          $region54: #{_elr_forward_impl.1} parent=47 // loop_footer_branch
            %98 = sbr.rel target = $region50
          $region55: #{_elr_forward_impl.1} parent=47 // loop_exit
            _
        $region48: #{_elr_forward_impl.1} parent=32 // pred_fallthru
          _
        %p108 = pneg %p94
        // Predicated region
        $region56: #{_elr_forward_impl.1} parent=32 // pred_check
          _
        $region57: #{_elr_forward_impl.1} parent=32 // pred_check_branch
          %110 = sbr.rel (%p94) target = $region59
        $region58: #{_elr_forward_impl.1} parent=32 // pred_region
          %s111 = sand.u32 8, 7
        $region59: #{_elr_forward_impl.1} parent=32 // pred_fallthru
          _
      $region33: #{_elr_forward_impl.1} parent=28 // pred_fallthru
        _
      // Predicated region
      $region34: #{_elr_forward_impl.1} parent=28 // pred_check
        %p78 = pneg %p74
      $region35: #{_elr_forward_impl.1} parent=28 // pred_check_branch
        %80 = sbr.rel (%p78) target = $region37
      $region36: #{_elr_forward_impl.1} parent=28 // pred_region
        %s81 = sshll.u32 1, 8
        %s82 = ssub.s32 %s81, 1
        loop: start=0, step=1, limit=1
        $region38: #{_elr_forward_impl.1} parent=36 // loop_pre_header
          _
        $region39: #{_elr_forward_impl.1} parent=36 // loop_header
          %s84 = sphi 0, %s88
          %p85 = scmp.ge.s32.totalorder %s84, 1
          %s89 = sphi %s72, %s72
          %s90 = sphi [#allocation2], [#allocation2]
        $region40: #{_elr_forward_impl.1} parent=36 // loop_header_branch
          %87 = sbr.rel (%p85) target = $region44
        $region41: #{_elr_forward_impl.1} parent=36 // loop_body
          %v91 = vld [vmem:[%s89] sm:%s82]
          %92 = vst [vmem:[%s90] sm:%s82] %v91
        $region42: #{_elr_forward_impl.1} parent=36 // loop_footer
          %s88 = sadd.s32 1, %s84
        $region43: #{_elr_forward_impl.1} parent=36 // loop_footer_branch
          %83 = sbr.rel target = $region39
        $region44: #{_elr_forward_impl.1} parent=36 // loop_exit
          _
      $region37: #{_elr_forward_impl.1} parent=28 // pred_fallthru
        _
      // Predicated region
      $region60: #{_elr_forward_impl.1} parent=28 // pred_check
        _
      $region61: #{_elr_forward_impl.1} parent=28 // pred_check_branch
        %114 = sbr.rel (0) target = $region63
      $region62: #{_elr_forward_impl.1} parent=28 // pred_region
        %115 = vsyncadd [#allocation3], 128
      $region63: #{_elr_forward_impl.1} parent=28 // pred_fallthru
        _
    $region29: #{_elr_forward_impl.1} parent=1 // pred_fallthru
      _
    // Predicated region
    $region64: #{_elr_forward_impl.1} parent=1 // pred_check
      %p116 = pneg %p68
    $region65: #{_elr_forward_impl.1} parent=1 // pred_check_branch
      %118 = sbr.rel (%p116) target = $region67
    $region66: #{_elr_forward_impl.1} parent=1 // pred_region
      %s119 = scalar_lea.vmem %s5, %s36
      %p121 = scmp.lt.u32.totalorder 1, 8
      %p122 = pneg %p121
      // Predicated region
      $region68: #{_elr_forward_impl.1} parent=66 // pred_check
        _
      $region69: #{_elr_forward_impl.1} parent=66 // pred_check_branch
        %124 = sbr.rel (%p121) target = $region71
      $region70: #{_elr_forward_impl.1} parent=66 // pred_region
        %s140 = sand.u32 1, 7
        %p141 = scmp.eq.s32.totalorder %s140, 0
        %p142 = pneg %p141
        // Predicated region
        $region83: #{_elr_forward_impl.1} parent=70 // pred_check
          _
        $region84: #{_elr_forward_impl.1} parent=70 // pred_check_branch
          %144 = sbr.rel (%p141) target = $region86
        $region85: #{_elr_forward_impl.1} parent=70 // pred_region
          %s145 = sand.u32 1, 7
          %s146 = ssub.s32 1, %s145
          %s147 = scalar_lea.vmem %s119, %s146
          %s148 = ssub.s32 1, %s145
          %s149 = scalar_lea.vmem [#allocation2], %s148
          %s150 = sshll.u32 1, %s145
          %s151 = ssub.s32 %s150, 1
          loop: start=0, step=1, limit=1
          $region87: #{_elr_forward_impl.1} parent=85 // loop_pre_header
            _
          $region88: #{_elr_forward_impl.1} parent=85 // loop_header
            %s153 = sphi 0, %s157
            %p154 = scmp.ge.s32.totalorder %s153, 1
            %s158 = sphi %s147, %s147
            %s159 = sphi %s149, %s149
          $region89: #{_elr_forward_impl.1} parent=85 // loop_header_branch
            %156 = sbr.rel (%p154) target = $region93
          $region90: #{_elr_forward_impl.1} parent=85 // loop_body
            %v160 = vld [vmem:[%s158] sm:%s151]
            %161 = vst [vmem:[%s159] sm:%s151] %v160
          $region91: #{_elr_forward_impl.1} parent=85 // loop_footer
            %s157 = sadd.s32 1, %s153
          $region92: #{_elr_forward_impl.1} parent=85 // loop_footer_branch
            %152 = sbr.rel target = $region88
          $region93: #{_elr_forward_impl.1} parent=85 // loop_exit
            _
        $region86: #{_elr_forward_impl.1} parent=70 // pred_fallthru
          _
      $region71: #{_elr_forward_impl.1} parent=66 // pred_fallthru
        _
      // Predicated region
      $region72: #{_elr_forward_impl.1} parent=66 // pred_check
        %p125 = pneg %p121
      $region73: #{_elr_forward_impl.1} parent=66 // pred_check_branch
        %127 = sbr.rel (%p125) target = $region75
      $region74: #{_elr_forward_impl.1} parent=66 // pred_region
        %s128 = sshll.u32 1, 1
        %s129 = ssub.s32 %s128, 1
        loop: start=0, step=1, limit=1
        $region76: #{_elr_forward_impl.1} parent=74 // loop_pre_header
          _
        $region77: #{_elr_forward_impl.1} parent=74 // loop_header
          %s131 = sphi 0, %s135
          %p132 = scmp.ge.s32.totalorder %s131, 1
          %s136 = sphi %s119, %s119
          %s137 = sphi [#allocation2], [#allocation2]
        $region78: #{_elr_forward_impl.1} parent=74 // loop_header_branch
          %134 = sbr.rel (%p132) target = $region82
        $region79: #{_elr_forward_impl.1} parent=74 // loop_body
          %v138 = vld [vmem:[%s136] sm:%s129]
          %139 = vst [vmem:[%s137] sm:%s129] %v138
        $region80: #{_elr_forward_impl.1} parent=74 // loop_footer
          %s135 = sadd.s32 1, %s131
        $region81: #{_elr_forward_impl.1} parent=74 // loop_footer_branch
          %130 = sbr.rel target = $region77
        $region82: #{_elr_forward_impl.1} parent=74 // loop_exit
          _
      $region75: #{_elr_forward_impl.1} parent=66 // pred_fallthru
        _
      // Predicated region
      $region94: #{_elr_forward_impl.1} parent=66 // pred_check
        _
      $region95: #{_elr_forward_impl.1} parent=66 // pred_check_branch
        %164 = sbr.rel (0) target = $region97
      $region96: #{_elr_forward_impl.1} parent=66 // pred_region
        %165 = vsyncadd [#allocation3], 16
      $region97: #{_elr_forward_impl.1} parent=66 // pred_fallthru
        _
      %s166 = scalar_lea.vmem %s5, %s37
      %s167 = scalar_lea.vmem [#allocation2], 1
      %s168 = scalar_lea.sflag [#allocation3], 1
      %p170 = scmp.lt.u32.totalorder 1, 8
      %p171 = pneg %p170
      // Predicated region
      $region98: #{_elr_forward_impl.1} parent=66 // pred_check
        _
      $region99: #{_elr_forward_impl.1} parent=66 // pred_check_branch
        %173 = sbr.rel (%p170) target = $region101
      $region100: #{_elr_forward_impl.1} parent=66 // pred_region
        %s189 = sand.u32 1, 7
        %p190 = scmp.eq.s32.totalorder %s189, 0
        %p191 = pneg %p190
        // Predicated region
        $region113: #{_elr_forward_impl.1} parent=100 // pred_check
          _
        $region114: #{_elr_forward_impl.1} parent=100 // pred_check_branch
          %193 = sbr.rel (%p190) target = $region116
        $region115: #{_elr_forward_impl.1} parent=100 // pred_region
          %s194 = sand.u32 1, 7
          %s195 = ssub.s32 1, %s194
          %s196 = scalar_lea.vmem %s166, %s195
          %s197 = ssub.s32 1, %s194
          %s198 = scalar_lea.vmem %s167, %s197 [#allocation2]
          %s199 = sshll.u32 1, %s194
          %s200 = ssub.s32 %s199, 1
          loop: start=0, step=1, limit=1
          $region117: #{_elr_forward_impl.1} parent=115 // loop_pre_header
            _
          $region118: #{_elr_forward_impl.1} parent=115 // loop_header
            %s202 = sphi 0, %s206
            %p203 = scmp.ge.s32.totalorder %s202, 1
            %s207 = sphi %s196, %s196
            %s208 = sphi %s198, %s198
          $region119: #{_elr_forward_impl.1} parent=115 // loop_header_branch
            %205 = sbr.rel (%p203) target = $region123
          $region120: #{_elr_forward_impl.1} parent=115 // loop_body
            %v209 = vld [vmem:[%s207] sm:%s200]
            %210 = vst [vmem:[%s208] sm:%s200] %v209
          $region121: #{_elr_forward_impl.1} parent=115 // loop_footer
            %s206 = sadd.s32 1, %s202
          $region122: #{_elr_forward_impl.1} parent=115 // loop_footer_branch
            %201 = sbr.rel target = $region118
          $region123: #{_elr_forward_impl.1} parent=115 // loop_exit
            _
        $region116: #{_elr_forward_impl.1} parent=100 // pred_fallthru
          _
      $region101: #{_elr_forward_impl.1} parent=66 // pred_fallthru
        _
      // Predicated region
      $region102: #{_elr_forward_impl.1} parent=66 // pred_check
        %p174 = pneg %p170
      $region103: #{_elr_forward_impl.1} parent=66 // pred_check_branch
        %176 = sbr.rel (%p174) target = $region105
      $region104: #{_elr_forward_impl.1} parent=66 // pred_region
        %s177 = sshll.u32 1, 1
        %s178 = ssub.s32 %s177, 1
        loop: start=0, step=1, limit=1
        $region106: #{_elr_forward_impl.1} parent=104 // loop_pre_header
          _
        $region107: #{_elr_forward_impl.1} parent=104 // loop_header
          %s180 = sphi 0, %s184
          %p181 = scmp.ge.s32.totalorder %s180, 1
          %s185 = sphi %s166, %s166
          %s186 = sphi %s167, %s167
        $region108: #{_elr_forward_impl.1} parent=104 // loop_header_branch
          %183 = sbr.rel (%p181) target = $region112
        $region109: #{_elr_forward_impl.1} parent=104 // loop_body
          %v187 = vld [vmem:[%s185] sm:%s178]
          %188 = vst [vmem:[%s186] sm:%s178] %v187
        $region110: #{_elr_forward_impl.1} parent=104 // loop_footer
          %s184 = sadd.s32 1, %s180
        $region111: #{_elr_forward_impl.1} parent=104 // loop_footer_branch
          %179 = sbr.rel target = $region107
        $region112: #{_elr_forward_impl.1} parent=104 // loop_exit
          _
      $region105: #{_elr_forward_impl.1} parent=66 // pred_fallthru
        _
      // Predicated region
      $region124: #{_elr_forward_impl.1} parent=66 // pred_check
        _
      $region125: #{_elr_forward_impl.1} parent=66 // pred_check_branch
        %213 = sbr.rel (0) target = $region127
      $region126: #{_elr_forward_impl.1} parent=66 // pred_region
        %214 = vsyncadd %s168, 16
      $region127: #{_elr_forward_impl.1} parent=66 // pred_fallthru
        _
      %s215 = scalar_lea.vmem %s5, %s38
      %s216 = scalar_lea.vmem [#allocation2], 2
      %s217 = scalar_lea.sflag [#allocation3], 2
      %p219 = scmp.lt.u32.totalorder 1, 8
      %p220 = pneg %p219
      // Predicated region
      $region128: #{_elr_forward_impl.1} parent=66 // pred_check
        _
      $region129: #{_elr_forward_impl.1} parent=66 // pred_check_branch
        %222 = sbr.rel (%p219) target = $region131
      $region130: #{_elr_forward_impl.1} parent=66 // pred_region
        %s238 = sand.u32 1, 7
        %p239 = scmp.eq.s32.totalorder %s238, 0
        %p240 = pneg %p239
        // Predicated region
        $region143: #{_elr_forward_impl.1} parent=130 // pred_check
          _
        $region144: #{_elr_forward_impl.1} parent=130 // pred_check_branch
          %242 = sbr.rel (%p239) target = $region146
        $region145: #{_elr_forward_impl.1} parent=130 // pred_region
          %s243 = sand.u32 1, 7
          %s244 = ssub.s32 1, %s243
          %s245 = scalar_lea.vmem %s215, %s244
          %s246 = ssub.s32 1, %s243
          %s247 = scalar_lea.vmem %s216, %s246 [#allocation2]
          %s248 = sshll.u32 1, %s243
          %s249 = ssub.s32 %s248, 1
          loop: start=0, step=1, limit=1
          $region147: #{_elr_forward_impl.1} parent=145 // loop_pre_header
            _
          $region148: #{_elr_forward_impl.1} parent=145 // loop_header
            %s251 = sphi 0, %s255
            %p252 = scmp.ge.s32.totalorder %s251, 1
            %s256 = sphi %s245, %s245
            %s257 = sphi %s247, %s247
          $region149: #{_elr_forward_impl.1} parent=145 // loop_header_branch
            %254 = sbr.rel (%p252) target = $region153
          $region150: #{_elr_forward_impl.1} parent=145 // loop_body
            %v258 = vld [vmem:[%s256] sm:%s249]
            %259 = vst [vmem:[%s257] sm:%s249] %v258
          $region151: #{_elr_forward_impl.1} parent=145 // loop_footer
            %s255 = sadd.s32 1, %s251
          $region152: #{_elr_forward_impl.1} parent=145 // loop_footer_branch
            %250 = sbr.rel target = $region148
          $region153: #{_elr_forward_impl.1} parent=145 // loop_exit
            _
        $region146: #{_elr_forward_impl.1} parent=130 // pred_fallthru
          _
      $region131: #{_elr_forward_impl.1} parent=66 // pred_fallthru
        _
      // Predicated region
      $region132: #{_elr_forward_impl.1} parent=66 // pred_check
        %p223 = pneg %p219
      $region133: #{_elr_forward_impl.1} parent=66 // pred_check_branch
        %225 = sbr.rel (%p223) target = $region135
      $region134: #{_elr_forward_impl.1} parent=66 // pred_region
        %s226 = sshll.u32 1, 1
        %s227 = ssub.s32 %s226, 1
        loop: start=0, step=1, limit=1
        $region136: #{_elr_forward_impl.1} parent=134 // loop_pre_header
          _
        $region137: #{_elr_forward_impl.1} parent=134 // loop_header
          %s229 = sphi 0, %s233
          %p230 = scmp.ge.s32.totalorder %s229, 1
          %s234 = sphi %s215, %s215
          %s235 = sphi %s216, %s216
        $region138: #{_elr_forward_impl.1} parent=134 // loop_header_branch
          %232 = sbr.rel (%p230) target = $region142
        $region139: #{_elr_forward_impl.1} parent=134 // loop_body
          %v236 = vld [vmem:[%s234] sm:%s227]
          %237 = vst [vmem:[%s235] sm:%s227] %v236
        $region140: #{_elr_forward_impl.1} parent=134 // loop_footer
          %s233 = sadd.s32 1, %s229
        $region141: #{_elr_forward_impl.1} parent=134 // loop_footer_branch
          %228 = sbr.rel target = $region137
        $region142: #{_elr_forward_impl.1} parent=134 // loop_exit
          _
      $region135: #{_elr_forward_impl.1} parent=66 // pred_fallthru
        _
      // Predicated region
      $region154: #{_elr_forward_impl.1} parent=66 // pred_check
        _
      $region155: #{_elr_forward_impl.1} parent=66 // pred_check_branch
        %262 = sbr.rel (0) target = $region157
      $region156: #{_elr_forward_impl.1} parent=66 // pred_region
        %263 = vsyncadd %s217, 16
      $region157: #{_elr_forward_impl.1} parent=66 // pred_fallthru
        _
      %s264 = scalar_lea.vmem %s5, %s39
      %s265 = scalar_lea.vmem [#allocation2], 3
      %s266 = scalar_lea.sflag [#allocation3], 3
      %p268 = scmp.lt.u32.totalorder 1, 8
      %p269 = pneg %p268
      // Predicated region
      $region158: #{_elr_forward_impl.1} parent=66 // pred_check
        _
      $region159: #{_elr_forward_impl.1} parent=66 // pred_check_branch
        %271 = sbr.rel (%p268) target = $region161
      $region160: #{_elr_forward_impl.1} parent=66 // pred_region
        %s287 = sand.u32 1, 7
        %p288 = scmp.eq.s32.totalorder %s287, 0
        %p289 = pneg %p288
        // Predicated region
        $region173: #{_elr_forward_impl.1} parent=160 // pred_check
          _
        $region174: #{_elr_forward_impl.1} parent=160 // pred_check_branch
          %291 = sbr.rel (%p288) target = $region176
        $region175: #{_elr_forward_impl.1} parent=160 // pred_region
          %s292 = sand.u32 1, 7
          %s293 = ssub.s32 1, %s292
          %s294 = scalar_lea.vmem %s264, %s293
          %s295 = ssub.s32 1, %s292
          %s296 = scalar_lea.vmem %s265, %s295 [#allocation2]
          %s297 = sshll.u32 1, %s292
          %s298 = ssub.s32 %s297, 1
          loop: start=0, step=1, limit=1
          $region177: #{_elr_forward_impl.1} parent=175 // loop_pre_header
            _
          $region178: #{_elr_forward_impl.1} parent=175 // loop_header
            %s300 = sphi 0, %s304
            %p301 = scmp.ge.s32.totalorder %s300, 1
            %s305 = sphi %s294, %s294
            %s306 = sphi %s296, %s296
          $region179: #{_elr_forward_impl.1} parent=175 // loop_header_branch
            %303 = sbr.rel (%p301) target = $region183
          $region180: #{_elr_forward_impl.1} parent=175 // loop_body
            %v307 = vld [vmem:[%s305] sm:%s298]
            %308 = vst [vmem:[%s306] sm:%s298] %v307
          $region181: #{_elr_forward_impl.1} parent=175 // loop_footer
            %s304 = sadd.s32 1, %s300
          $region182: #{_elr_forward_impl.1} parent=175 // loop_footer_branch
            %299 = sbr.rel target = $region178
          $region183: #{_elr_forward_impl.1} parent=175 // loop_exit
            _
        $region176: #{_elr_forward_impl.1} parent=160 // pred_fallthru
          _
      $region161: #{_elr_forward_impl.1} parent=66 // pred_fallthru
        _
      // Predicated region
      $region162: #{_elr_forward_impl.1} parent=66 // pred_check
        %p272 = pneg %p268
      $region163: #{_elr_forward_impl.1} parent=66 // pred_check_branch
        %274 = sbr.rel (%p272) target = $region165
      $region164: #{_elr_forward_impl.1} parent=66 // pred_region
        %s275 = sshll.u32 1, 1
        %s276 = ssub.s32 %s275, 1
        loop: start=0, step=1, limit=1
        $region166: #{_elr_forward_impl.1} parent=164 // loop_pre_header
          _
        $region167: #{_elr_forward_impl.1} parent=164 // loop_header
          %s278 = sphi 0, %s282
          %p279 = scmp.ge.s32.totalorder %s278, 1
          %s283 = sphi %s264, %s264
          %s284 = sphi %s265, %s265
        $region168: #{_elr_forward_impl.1} parent=164 // loop_header_branch
          %281 = sbr.rel (%p279) target = $region172
        $region169: #{_elr_forward_impl.1} parent=164 // loop_body
          %v285 = vld [vmem:[%s283] sm:%s276]
          %286 = vst [vmem:[%s284] sm:%s276] %v285
        $region170: #{_elr_forward_impl.1} parent=164 // loop_footer
          %s282 = sadd.s32 1, %s278
        $region171: #{_elr_forward_impl.1} parent=164 // loop_footer_branch
          %277 = sbr.rel target = $region167
        $region172: #{_elr_forward_impl.1} parent=164 // loop_exit
          _
      $region165: #{_elr_forward_impl.1} parent=66 // pred_fallthru
        _
      // Predicated region
      $region184: #{_elr_forward_impl.1} parent=66 // pred_check
        _
      $region185: #{_elr_forward_impl.1} parent=66 // pred_check_branch
        %311 = sbr.rel (0) target = $region187
      $region186: #{_elr_forward_impl.1} parent=66 // pred_region
        %312 = vsyncadd %s266, 16
      $region187: #{_elr_forward_impl.1} parent=66 // pred_fallthru
        _
      %s313 = scalar_lea.vmem %s5, %s40
      %s314 = scalar_lea.vmem [#allocation2], 4
      %s315 = scalar_lea.sflag [#allocation3], 4
      %p317 = scmp.lt.u32.totalorder 1, 8
      %p318 = pneg %p317
      // Predicated region
      $region188: #{_elr_forward_impl.1} parent=66 // pred_check
        _
      $region189: #{_elr_forward_impl.1} parent=66 // pred_check_branch
        %320 = sbr.rel (%p317) target = $region191
      $region190: #{_elr_forward_impl.1} parent=66 // pred_region
        %s336 = sand.u32 1, 7
        %p337 = scmp.eq.s32.totalorder %s336, 0
        %p338 = pneg %p337
        // Predicated region
        $region203: #{_elr_forward_impl.1} parent=190 // pred_check
          _
        $region204: #{_elr_forward_impl.1} parent=190 // pred_check_branch
          %340 = sbr.rel (%p337) target = $region206
        $region205: #{_elr_forward_impl.1} parent=190 // pred_region
          %s341 = sand.u32 1, 7
          %s342 = ssub.s32 1, %s341
          %s343 = scalar_lea.vmem %s313, %s342
          %s344 = ssub.s32 1, %s341
          %s345 = scalar_lea.vmem %s314, %s344 [#allocation2]
          %s346 = sshll.u32 1, %s341
          %s347 = ssub.s32 %s346, 1
          loop: start=0, step=1, limit=1
          $region207: #{_elr_forward_impl.1} parent=205 // loop_pre_header
            _
          $region208: #{_elr_forward_impl.1} parent=205 // loop_header
            %s349 = sphi 0, %s353
            %p350 = scmp.ge.s32.totalorder %s349, 1
            %s354 = sphi %s343, %s343
            %s355 = sphi %s345, %s345
          $region209: #{_elr_forward_impl.1} parent=205 // loop_header_branch
            %352 = sbr.rel (%p350) target = $region213
          $region210: #{_elr_forward_impl.1} parent=205 // loop_body
            %v356 = vld [vmem:[%s354] sm:%s347]
            %357 = vst [vmem:[%s355] sm:%s347] %v356
          $region211: #{_elr_forward_impl.1} parent=205 // loop_footer
            %s353 = sadd.s32 1, %s349
          $region212: #{_elr_forward_impl.1} parent=205 // loop_footer_branch
            %348 = sbr.rel target = $region208
          $region213: #{_elr_forward_impl.1} parent=205 // loop_exit
            _
        $region206: #{_elr_forward_impl.1} parent=190 // pred_fallthru
          _
      $region191: #{_elr_forward_impl.1} parent=66 // pred_fallthru
        _
      // Predicated region
      $region192: #{_elr_forward_impl.1} parent=66 // pred_check
        %p321 = pneg %p317
      $region193: #{_elr_forward_impl.1} parent=66 // pred_check_branch
        %323 = sbr.rel (%p321) target = $region195
      $region194: #{_elr_forward_impl.1} parent=66 // pred_region
        %s324 = sshll.u32 1, 1
        %s325 = ssub.s32 %s324, 1
        loop: start=0, step=1, limit=1
        $region196: #{_elr_forward_impl.1} parent=194 // loop_pre_header
          _
        $region197: #{_elr_forward_impl.1} parent=194 // loop_header
          %s327 = sphi 0, %s331
          %p328 = scmp.ge.s32.totalorder %s327, 1
          %s332 = sphi %s313, %s313
          %s333 = sphi %s314, %s314
        $region198: #{_elr_forward_impl.1} parent=194 // loop_header_branch
          %330 = sbr.rel (%p328) target = $region202
        $region199: #{_elr_forward_impl.1} parent=194 // loop_body
          %v334 = vld [vmem:[%s332] sm:%s325]
          %335 = vst [vmem:[%s333] sm:%s325] %v334
        $region200: #{_elr_forward_impl.1} parent=194 // loop_footer
          %s331 = sadd.s32 1, %s327
        $region201: #{_elr_forward_impl.1} parent=194 // loop_footer_branch
          %326 = sbr.rel target = $region197
        $region202: #{_elr_forward_impl.1} parent=194 // loop_exit
          _
      $region195: #{_elr_forward_impl.1} parent=66 // pred_fallthru
        _
      // Predicated region
      $region214: #{_elr_forward_impl.1} parent=66 // pred_check
        _
      $region215: #{_elr_forward_impl.1} parent=66 // pred_check_branch
        %360 = sbr.rel (0) target = $region217
      $region216: #{_elr_forward_impl.1} parent=66 // pred_region
        %361 = vsyncadd %s315, 16
      $region217: #{_elr_forward_impl.1} parent=66 // pred_fallthru
        _
      %s362 = scalar_lea.vmem %s5, %s41
      %s363 = scalar_lea.vmem [#allocation2], 5
      %s364 = scalar_lea.sflag [#allocation3], 5
      %p366 = scmp.lt.u32.totalorder 1, 8
      %p367 = pneg %p366
      // Predicated region
      $region218: #{_elr_forward_impl.1} parent=66 // pred_check
        _
      $region219: #{_elr_forward_impl.1} parent=66 // pred_check_branch
        %369 = sbr.rel (%p366) target = $region221
      $region220: #{_elr_forward_impl.1} parent=66 // pred_region
        %s385 = sand.u32 1, 7
        %p386 = scmp.eq.s32.totalorder %s385, 0
        %p387 = pneg %p386
        // Predicated region
        $region233: #{_elr_forward_impl.1} parent=220 // pred_check
          _
        $region234: #{_elr_forward_impl.1} parent=220 // pred_check_branch
          %389 = sbr.rel (%p386) target = $region236
        $region235: #{_elr_forward_impl.1} parent=220 // pred_region
          %s390 = sand.u32 1, 7
          %s391 = ssub.s32 1, %s390
          %s392 = scalar_lea.vmem %s362, %s391
          %s393 = ssub.s32 1, %s390
          %s394 = scalar_lea.vmem %s363, %s393 [#allocation2]
          %s395 = sshll.u32 1, %s390
          %s396 = ssub.s32 %s395, 1
          loop: start=0, step=1, limit=1
          $region237: #{_elr_forward_impl.1} parent=235 // loop_pre_header
            _
          $region238: #{_elr_forward_impl.1} parent=235 // loop_header
            %s398 = sphi 0, %s402
            %p399 = scmp.ge.s32.totalorder %s398, 1
            %s403 = sphi %s392, %s392
            %s404 = sphi %s394, %s394
          $region239: #{_elr_forward_impl.1} parent=235 // loop_header_branch
            %401 = sbr.rel (%p399) target = $region243
          $region240: #{_elr_forward_impl.1} parent=235 // loop_body
            %v405 = vld [vmem:[%s403] sm:%s396]
            %406 = vst [vmem:[%s404] sm:%s396] %v405
          $region241: #{_elr_forward_impl.1} parent=235 // loop_footer
            %s402 = sadd.s32 1, %s398
          $region242: #{_elr_forward_impl.1} parent=235 // loop_footer_branch
            %397 = sbr.rel target = $region238
          $region243: #{_elr_forward_impl.1} parent=235 // loop_exit
            _
        $region236: #{_elr_forward_impl.1} parent=220 // pred_fallthru
          _
      $region221: #{_elr_forward_impl.1} parent=66 // pred_fallthru
        _
      // Predicated region
      $region222: #{_elr_forward_impl.1} parent=66 // pred_check
        %p370 = pneg %p366
      $region223: #{_elr_forward_impl.1} parent=66 // pred_check_branch
        %372 = sbr.rel (%p370) target = $region225
      $region224: #{_elr_forward_impl.1} parent=66 // pred_region
        %s373 = sshll.u32 1, 1
        %s374 = ssub.s32 %s373, 1
        loop: start=0, step=1, limit=1
        $region226: #{_elr_forward_impl.1} parent=224 // loop_pre_header
          _
        $region227: #{_elr_forward_impl.1} parent=224 // loop_header
          %s376 = sphi 0, %s380
          %p377 = scmp.ge.s32.totalorder %s376, 1
          %s381 = sphi %s362, %s362
          %s382 = sphi %s363, %s363
        $region228: #{_elr_forward_impl.1} parent=224 // loop_header_branch
          %379 = sbr.rel (%p377) target = $region232
        $region229: #{_elr_forward_impl.1} parent=224 // loop_body
          %v383 = vld [vmem:[%s381] sm:%s374]
          %384 = vst [vmem:[%s382] sm:%s374] %v383
        $region230: #{_elr_forward_impl.1} parent=224 // loop_footer
          %s380 = sadd.s32 1, %s376
        $region231: #{_elr_forward_impl.1} parent=224 // loop_footer_branch
          %375 = sbr.rel target = $region227
        $region232: #{_elr_forward_impl.1} parent=224 // loop_exit
          _
      $region225: #{_elr_forward_impl.1} parent=66 // pred_fallthru
        _
      // Predicated region
      $region244: #{_elr_forward_impl.1} parent=66 // pred_check
        _
      $region245: #{_elr_forward_impl.1} parent=66 // pred_check_branch
        %409 = sbr.rel (0) target = $region247
      $region246: #{_elr_forward_impl.1} parent=66 // pred_region
        %410 = vsyncadd %s364, 16
      $region247: #{_elr_forward_impl.1} parent=66 // pred_fallthru
        _
      %s411 = scalar_lea.vmem %s5, %s42
      %s412 = scalar_lea.vmem [#allocation2], 6
      %s413 = scalar_lea.sflag [#allocation3], 6
      %p415 = scmp.lt.u32.totalorder 1, 8
      %p416 = pneg %p415
      // Predicated region
      $region248: #{_elr_forward_impl.1} parent=66 // pred_check
        _
      $region249: #{_elr_forward_impl.1} parent=66 // pred_check_branch
        %418 = sbr.rel (%p415) target = $region251
      $region250: #{_elr_forward_impl.1} parent=66 // pred_region
        %s434 = sand.u32 1, 7
        %p435 = scmp.eq.s32.totalorder %s434, 0
        %p436 = pneg %p435
        // Predicated region
        $region263: #{_elr_forward_impl.1} parent=250 // pred_check
          _
        $region264: #{_elr_forward_impl.1} parent=250 // pred_check_branch
          %438 = sbr.rel (%p435) target = $region266
        $region265: #{_elr_forward_impl.1} parent=250 // pred_region
          %s439 = sand.u32 1, 7
          %s440 = ssub.s32 1, %s439
          %s441 = scalar_lea.vmem %s411, %s440
          %s442 = ssub.s32 1, %s439
          %s443 = scalar_lea.vmem %s412, %s442 [#allocation2]
          %s444 = sshll.u32 1, %s439
          %s445 = ssub.s32 %s444, 1
          loop: start=0, step=1, limit=1
          $region267: #{_elr_forward_impl.1} parent=265 // loop_pre_header
            _
          $region268: #{_elr_forward_impl.1} parent=265 // loop_header
            %s447 = sphi 0, %s451
            %p448 = scmp.ge.s32.totalorder %s447, 1
            %s452 = sphi %s441, %s441
            %s453 = sphi %s443, %s443
          $region269: #{_elr_forward_impl.1} parent=265 // loop_header_branch
            %450 = sbr.rel (%p448) target = $region273
          $region270: #{_elr_forward_impl.1} parent=265 // loop_body
            %v454 = vld [vmem:[%s452] sm:%s445]
            %455 = vst [vmem:[%s453] sm:%s445] %v454
          $region271: #{_elr_forward_impl.1} parent=265 // loop_footer
            %s451 = sadd.s32 1, %s447
          $region272: #{_elr_forward_impl.1} parent=265 // loop_footer_branch
            %446 = sbr.rel target = $region268
          $region273: #{_elr_forward_impl.1} parent=265 // loop_exit
            _
        $region266: #{_elr_forward_impl.1} parent=250 // pred_fallthru
          _
      $region251: #{_elr_forward_impl.1} parent=66 // pred_fallthru
        _
      // Predicated region
      $region252: #{_elr_forward_impl.1} parent=66 // pred_check
        %p419 = pneg %p415
      $region253: #{_elr_forward_impl.1} parent=66 // pred_check_branch
        %421 = sbr.rel (%p419) target = $region255
      $region254: #{_elr_forward_impl.1} parent=66 // pred_region
        %s422 = sshll.u32 1, 1
        %s423 = ssub.s32 %s422, 1
        loop: start=0, step=1, limit=1
        $region256: #{_elr_forward_impl.1} parent=254 // loop_pre_header
          _
        $region257: #{_elr_forward_impl.1} parent=254 // loop_header
          %s425 = sphi 0, %s429
          %p426 = scmp.ge.s32.totalorder %s425, 1
          %s430 = sphi %s411, %s411
          %s431 = sphi %s412, %s412
        $region258: #{_elr_forward_impl.1} parent=254 // loop_header_branch
          %428 = sbr.rel (%p426) target = $region262
        $region259: #{_elr_forward_impl.1} parent=254 // loop_body
          %v432 = vld [vmem:[%s430] sm:%s423]
          %433 = vst [vmem:[%s431] sm:%s423] %v432
        $region260: #{_elr_forward_impl.1} parent=254 // loop_footer
          %s429 = sadd.s32 1, %s425
        $region261: #{_elr_forward_impl.1} parent=254 // loop_footer_branch
          %424 = sbr.rel target = $region257
        $region262: #{_elr_forward_impl.1} parent=254 // loop_exit
          _
      $region255: #{_elr_forward_impl.1} parent=66 // pred_fallthru
        _
      // Predicated region
      $region274: #{_elr_forward_impl.1} parent=66 // pred_check
        _
      $region275: #{_elr_forward_impl.1} parent=66 // pred_check_branch
        %458 = sbr.rel (0) target = $region277
      $region276: #{_elr_forward_impl.1} parent=66 // pred_region
        %459 = vsyncadd %s413, 16
      $region277: #{_elr_forward_impl.1} parent=66 // pred_fallthru
        _
      %s460 = scalar_lea.vmem %s5, %s43
      %s461 = scalar_lea.vmem [#allocation2], 7
      %s462 = scalar_lea.sflag [#allocation3], 7
      %p464 = scmp.lt.u32.totalorder 1, 8
      %p465 = pneg %p464
      // Predicated region
      $region278: #{_elr_forward_impl.1} parent=66 // pred_check
        _
      $region279: #{_elr_forward_impl.1} parent=66 // pred_check_branch
        %467 = sbr.rel (%p464) target = $region281
      $region280: #{_elr_forward_impl.1} parent=66 // pred_region
        %s483 = sand.u32 1, 7
        %p484 = scmp.eq.s32.totalorder %s483, 0
        %p485 = pneg %p484
        // Predicated region
        $region293: #{_elr_forward_impl.1} parent=280 // pred_check
          _
        $region294: #{_elr_forward_impl.1} parent=280 // pred_check_branch
          %487 = sbr.rel (%p484) target = $region296
        $region295: #{_elr_forward_impl.1} parent=280 // pred_region
          %s488 = sand.u32 1, 7
          %s489 = ssub.s32 1, %s488
          %s490 = scalar_lea.vmem %s460, %s489
          %s491 = ssub.s32 1, %s488
          %s492 = scalar_lea.vmem %s461, %s491 [#allocation2]
          %s493 = sshll.u32 1, %s488
          %s494 = ssub.s32 %s493, 1
          loop: start=0, step=1, limit=1
          $region297: #{_elr_forward_impl.1} parent=295 // loop_pre_header
            _
          $region298: #{_elr_forward_impl.1} parent=295 // loop_header
            %s496 = sphi 0, %s500
            %p497 = scmp.ge.s32.totalorder %s496, 1
            %s501 = sphi %s490, %s490
            %s502 = sphi %s492, %s492
          $region299: #{_elr_forward_impl.1} parent=295 // loop_header_branch
            %499 = sbr.rel (%p497) target = $region303
          $region300: #{_elr_forward_impl.1} parent=295 // loop_body
            %v503 = vld [vmem:[%s501] sm:%s494]
            %504 = vst [vmem:[%s502] sm:%s494] %v503
          $region301: #{_elr_forward_impl.1} parent=295 // loop_footer
            %s500 = sadd.s32 1, %s496
          $region302: #{_elr_forward_impl.1} parent=295 // loop_footer_branch
            %495 = sbr.rel target = $region298
          $region303: #{_elr_forward_impl.1} parent=295 // loop_exit
            _
        $region296: #{_elr_forward_impl.1} parent=280 // pred_fallthru
          _
      $region281: #{_elr_forward_impl.1} parent=66 // pred_fallthru
        _
      // Predicated region
      $region282: #{_elr_forward_impl.1} parent=66 // pred_check
        %p468 = pneg %p464
      $region283: #{_elr_forward_impl.1} parent=66 // pred_check_branch
        %470 = sbr.rel (%p468) target = $region285
      $region284: #{_elr_forward_impl.1} parent=66 // pred_region
        %s471 = sshll.u32 1, 1
        %s472 = ssub.s32 %s471, 1
        loop: start=0, step=1, limit=1
        $region286: #{_elr_forward_impl.1} parent=284 // loop_pre_header
          _
        $region287: #{_elr_forward_impl.1} parent=284 // loop_header
          %s474 = sphi 0, %s478
          %p475 = scmp.ge.s32.totalorder %s474, 1
          %s479 = sphi %s460, %s460
          %s480 = sphi %s461, %s461
        $region288: #{_elr_forward_impl.1} parent=284 // loop_header_branch
          %477 = sbr.rel (%p475) target = $region292
        $region289: #{_elr_forward_impl.1} parent=284 // loop_body
          %v481 = vld [vmem:[%s479] sm:%s472]
          %482 = vst [vmem:[%s480] sm:%s472] %v481
        $region290: #{_elr_forward_impl.1} parent=284 // loop_footer
          %s478 = sadd.s32 1, %s474
        $region291: #{_elr_forward_impl.1} parent=284 // loop_footer_branch
          %473 = sbr.rel target = $region287
        $region292: #{_elr_forward_impl.1} parent=284 // loop_exit
          _
      $region285: #{_elr_forward_impl.1} parent=66 // pred_fallthru
        _
      // Predicated region
      $region304: #{_elr_forward_impl.1} parent=66 // pred_check
        _
      $region305: #{_elr_forward_impl.1} parent=66 // pred_check_branch
        %507 = sbr.rel (0) target = $region307
      $region306: #{_elr_forward_impl.1} parent=66 // pred_region
        %508 = vsyncadd %s462, 16
      $region307: #{_elr_forward_impl.1} parent=66 // pred_fallthru
        _
    $region67: #{_elr_forward_impl.1} parent=1 // pred_fallthru
      _
    %v509 = vld [vmem:[%s3] sm:$0xff]
    %v510 = vld [vmem:[%s4] sm:$0xff]
    %v511 = vlaneseq
    %v512 = vand.u32 %v511, 127
    %v513 = vld [vmem:[%s1] sm:$0xff]
    %514 = vset.pattern.permute.xlu0 0
    %515 = vperm.xlu0 %514, %v513
    %v516 = vpop.permute.xlu0 %515
    %vm517 = vcmp.eq.s32.totalorder %v512, %v516
    %v518 = vsel %vm517, 1, 0
    %v519 = vcvt.s32.f32 %v518
    %v520 = vld [vmem:[%s2] sm:$0xff]
    %521 = vset.pattern.permute.xlu0 0
    %522 = vperm.xlu0 %521, %v520
    %v523 = vpop.permute.xlu0 %522
    %vm524 = vcmp.eq.s32.totalorder %v512, %v523
    %v525 = vsel %vm524, 1, 0
    %v526 = vcvt.s32.f32 %v525
    %vm527 = vcmp.eq.s32.totalorder %v513, %v520
    %v528 = vsel %vm527, 1, 0
    %v529 = vcvt.s32.f32 %v528
    %vm530 = vcmask 80896
    %v531 = vsel %vm530, %v509, -inf
    %532 = vmax.xlane.f32.xlu0 %v531
    %v533 = vpop.xlane.xlu0 %532
    %v534 = vsub.f32 %v509, %v533
    %v535 = vmul.f32 %v534, 1.442695
    %v536 = vpow.pop %v535
    %v537 = vsel %vm530, %v536, 0.0
    %538 = vadd.xlane.f32.xlu0 %v537
    %v539 = vpop.xlane.xlu0 %538
    %v540 = vrcp.pop %v539
    %v541 = vmul.f32 %v536, %v540
    %v542 = vmax.f32 %v541, 0.0001
    %v543 = vmin.f32 %v542, 0.9999
    %v544 = vsel %vm530, %v543, 0.0
    %545 = vadd.xlane.f32.xlu0 %v544
    %v546 = vpop.xlane.xlu0 %545
    %v547 = vrcp.pop %v546
    %v548 = vmul.f32 %v543, %v547
    %v549 = vmul.f32 %v543, %v526
    %v550 = vsel %vm530, %v549, 0.0
    %551 = vadd.xlane.f32.xlu0 %v550
    %v552 = vpop.xlane.xlu0 %551
    %v553 = vlog2.pop %v539
    %v554 = vmul.f32 %v553, 0.6931472
    %v555 = vadd.f32 %v533, %v554
    %v556 = vmul.f32 %v509, %v519
    %v557 = vsel %vm530, %v556, 0.0
    %558 = vadd.xlane.f32.xlu0 %v557
    %v559 = vpop.xlane.xlu0 %558
    %v560 = vsub.f32 %v555, %v559
    %v561 = vrot.slane %v560, 4
    %v562 = vadd.f32 %v560, %v561
    %v563 = vrot.slane %v562, 2
    %v564 = vadd.f32 %v562, %v563
    %v565 = vrot.slane %v564, 1
    %v566 = vadd.f32 %v564, %v565
    %v567 = vmul.f32 %v566, 0.125
    %vm568 = vcmask 7168
    %v569 = vsel %vm568, %v510, 0.0
    %v570 = vrot.slane %v569, 4
    %v571 = vadd.f32 %v569, %v570
    %v572 = vrot.slane %v571, 2
    %v573 = vadd.f32 %v571, %v572
    %v574 = vrot.slane %v573, 1
    %v575 = vadd.f32 %v573, %v574
    %v576 = vmul.f32 %v510, %v510
    %v577 = vsel %vm568, %v576, 0.0
    %v578 = vrot.slane %v577, 4
    %v579 = vadd.f32 %v577, %v578
    %v580 = vrot.slane %v579, 2
    %v581 = vadd.f32 %v579, %v580
    %v582 = vrot.slane %v581, 1
    %v583 = vadd.f32 %v581, %v582
    %v584 = vrsqrt.pop %v583
    %v585 = vmul.f32 %v583, %v584
    %vm586 = vcmp.eq.f32.partialorder %v583, inf
    %v587 = vsel %vm586, %v583, %v585
    %vm588 = vcmp.eq.f32.partialorder %v583, 0.0
    %v589 = vand.u32 %v583, 2147483648
    %v590 = vsel %vm588, %v589, %v587
    // Predicated region
    $region308: #{_elr_forward_impl.1} parent=1 // pred_check
      _
    $region309: #{_elr_forward_impl.1} parent=1 // pred_check_branch
      %592 = sbr.rel (%p68) target = $region311
    $region310: #{_elr_forward_impl.1} parent=1 // pred_region
      %s593 = smul.u32 8, 1
      %s594 = sshll.u32 %s593, 4
      %595 = dma.done [#allocation3], %s594
    $region311: #{_elr_forward_impl.1} parent=1 // pred_fallthru
      _
    // Predicated region
    $region312: #{_elr_forward_impl.1} parent=1 // pred_check
      %p596 = pneg %p68
    $region313: #{_elr_forward_impl.1} parent=1 // pred_check_branch
      %598 = sbr.rel (%p596) target = $region315
    $region314: #{_elr_forward_impl.1} parent=1 // pred_region
      %s599 = smul.u32 1, 1
      %s600 = sshll.u32 %s599, 4
      %601 = dma.done [#allocation3], %s600
      %s602 = scalar_lea.sflag [#allocation3], 1
      %s603 = sshll.u32 %s599, 4
      %604 = dma.done %s602, %s603
      %s605 = scalar_lea.sflag [#allocation3], 2
      %s606 = sshll.u32 %s599, 4
      %607 = dma.done %s605, %s606
      %s608 = scalar_lea.sflag [#allocation3], 3
      %s609 = sshll.u32 %s599, 4
      %610 = dma.done %s608, %s609
      %s611 = scalar_lea.sflag [#allocation3], 4
      %s612 = sshll.u32 %s599, 4
      %613 = dma.done %s611, %s612
      %s614 = scalar_lea.sflag [#allocation3], 5
      %s615 = sshll.u32 %s599, 4
      %616 = dma.done %s614, %s615
      %s617 = scalar_lea.sflag [#allocation3], 6
      %s618 = sshll.u32 %s599, 4
      %619 = dma.done %s617, %s618
      %s620 = scalar_lea.sflag [#allocation3], 7
      %s621 = sshll.u32 %s599, 4
      %622 = dma.done %s620, %s621
    $region315: #{_elr_forward_impl.1} parent=1 // pred_fallthru
      _
    %v623 = vld [vmem:[#allocation2] sm:$0xff]
    %v624 = vmul.f32 %v623, 0.3
    %v625 = vmul.f32 %v548, 0.7
    %v626 = vadd.f32 %v624, %v625
    %627 = vst.msk [vmem:[#allocation2] sm:$0xff] %vm530, %v626
    // Predicated region
    $region316: #{_elr_forward_impl.1} parent=1 // pred_check
      _
    $region317: #{_elr_forward_impl.1} parent=1 // pred_check_branch
      %629 = sbr.rel (%p68) target = $region319
    $region318: #{_elr_forward_impl.1} parent=1 // pred_region
      %s630 = scalar_lea.vmem %s6, %s36
      %p632 = scmp.lt.u32.totalorder 8, 8
      %p633 = pneg %p632
      // Predicated region
      $region320: #{_elr_forward_impl.1} parent=318 // pred_check
        _
      $region321: #{_elr_forward_impl.1} parent=318 // pred_check_branch
        %635 = sbr.rel (%p632) target = $region323
      $region322: #{_elr_forward_impl.1} parent=318 // pred_region
        %s651 = sand.u32 8, 7
        %p652 = scmp.eq.s32.totalorder %s651, 0
        // Predicated region
        $region335: #{_elr_forward_impl.1} parent=322 // pred_check
          %p653 = pneg %p652
        $region336: #{_elr_forward_impl.1} parent=322 // pred_check_branch
          %655 = sbr.rel (%p653) target = $region338
        $region337: #{_elr_forward_impl.1} parent=322 // pred_region
          loop: start=0, step=1, limit=1
          $region339: #{_elr_forward_impl.1} parent=337 // loop_pre_header
            _
          $region340: #{_elr_forward_impl.1} parent=337 // loop_header
            %s657 = sphi 0, %s661
            %p658 = scmp.ge.s32.totalorder %s657, 1
            %s662 = sphi [#allocation2], [#allocation2]
            %s663 = sphi %s630, %s630
          $region341: #{_elr_forward_impl.1} parent=337 // loop_header_branch
            %660 = sbr.rel (%p658) target = $region345
          $region342: #{_elr_forward_impl.1} parent=337 // loop_body
            %v664 = vld [vmem:[%s662] sm:$0xff]
            %665 = vst [vmem:[%s663] sm:$0xff] %v664
          $region343: #{_elr_forward_impl.1} parent=337 // loop_footer
            %s661 = sadd.s32 1, %s657
          $region344: #{_elr_forward_impl.1} parent=337 // loop_footer_branch
            %656 = sbr.rel target = $region340
          $region345: #{_elr_forward_impl.1} parent=337 // loop_exit
            _
        $region338: #{_elr_forward_impl.1} parent=322 // pred_fallthru
          _
        %p666 = pneg %p652
        // Predicated region
        $region346: #{_elr_forward_impl.1} parent=322 // pred_check
          _
        $region347: #{_elr_forward_impl.1} parent=322 // pred_check_branch
          %668 = sbr.rel (%p652) target = $region349
        $region348: #{_elr_forward_impl.1} parent=322 // pred_region
          %s669 = sand.u32 8, 7
        $region349: #{_elr_forward_impl.1} parent=322 // pred_fallthru
          _
      $region323: #{_elr_forward_impl.1} parent=318 // pred_fallthru
        _
      // Predicated region
      $region324: #{_elr_forward_impl.1} parent=318 // pred_check
        %p636 = pneg %p632
      $region325: #{_elr_forward_impl.1} parent=318 // pred_check_branch
        %638 = sbr.rel (%p636) target = $region327
      $region326: #{_elr_forward_impl.1} parent=318 // pred_region
        %s639 = sshll.u32 1, 8
        %s640 = ssub.s32 %s639, 1
        loop: start=0, step=1, limit=1
        $region328: #{_elr_forward_impl.1} parent=326 // loop_pre_header
          _
        $region329: #{_elr_forward_impl.1} parent=326 // loop_header
          %s642 = sphi 0, %s646
          %p643 = scmp.ge.s32.totalorder %s642, 1
          %s647 = sphi [#allocation2], [#allocation2]
          %s648 = sphi %s630, %s630
        $region330: #{_elr_forward_impl.1} parent=326 // loop_header_branch
          %645 = sbr.rel (%p643) target = $region334
        $region331: #{_elr_forward_impl.1} parent=326 // loop_body
          %v649 = vld [vmem:[%s647] sm:%s640]
          %650 = vst [vmem:[%s648] sm:%s640] %v649
        $region332: #{_elr_forward_impl.1} parent=326 // loop_footer
          %s646 = sadd.s32 1, %s642
        $region333: #{_elr_forward_impl.1} parent=326 // loop_footer_branch
          %641 = sbr.rel target = $region329
        $region334: #{_elr_forward_impl.1} parent=326 // loop_exit
          _
      $region327: #{_elr_forward_impl.1} parent=318 // pred_fallthru
        _
      // Predicated region
      $region350: #{_elr_forward_impl.1} parent=318 // pred_check
        _
      $region351: #{_elr_forward_impl.1} parent=318 // pred_check_branch
        %672 = sbr.rel (0) target = $region353
      $region352: #{_elr_forward_impl.1} parent=318 // pred_region
        %673 = vsyncadd [#allocation3], 128
      $region353: #{_elr_forward_impl.1} parent=318 // pred_fallthru
        _
    $region319: #{_elr_forward_impl.1} parent=1 // pred_fallthru
      _
    // Predicated region
    $region354: #{_elr_forward_impl.1} parent=1 // pred_check
      %p674 = pneg %p68
    $region355: #{_elr_forward_impl.1} parent=1 // pred_check_branch
      %676 = sbr.rel (%p674) target = $region357
    $region356: #{_elr_forward_impl.1} parent=1 // pred_region
      %s677 = scalar_lea.vmem %s6, %s36
      %p679 = scmp.lt.u32.totalorder 1, 8
      %p680 = pneg %p679
      // Predicated region
      $region358: #{_elr_forward_impl.1} parent=356 // pred_check
        _
      $region359: #{_elr_forward_impl.1} parent=356 // pred_check_branch
        %682 = sbr.rel (%p679) target = $region361
      $region360: #{_elr_forward_impl.1} parent=356 // pred_region
        %s698 = sand.u32 1, 7
        %p699 = scmp.eq.s32.totalorder %s698, 0
        %p700 = pneg %p699
        // Predicated region
        $region373: #{_elr_forward_impl.1} parent=360 // pred_check
          _
        $region374: #{_elr_forward_impl.1} parent=360 // pred_check_branch
          %702 = sbr.rel (%p699) target = $region376
        $region375: #{_elr_forward_impl.1} parent=360 // pred_region
          %s703 = sand.u32 1, 7
          %s704 = ssub.s32 1, %s703
          %s705 = scalar_lea.vmem [#allocation2], %s704
          %s706 = ssub.s32 1, %s703
          %s707 = scalar_lea.vmem %s677, %s706
          %s708 = sshll.u32 1, %s703
          %s709 = ssub.s32 %s708, 1
          loop: start=0, step=1, limit=1
          $region377: #{_elr_forward_impl.1} parent=375 // loop_pre_header
            _
          $region378: #{_elr_forward_impl.1} parent=375 // loop_header
            %s711 = sphi 0, %s715
            %p712 = scmp.ge.s32.totalorder %s711, 1
            %s716 = sphi %s705, %s705
            %s717 = sphi %s707, %s707
          $region379: #{_elr_forward_impl.1} parent=375 // loop_header_branch
            %714 = sbr.rel (%p712) target = $region383
          $region380: #{_elr_forward_impl.1} parent=375 // loop_body
            %v718 = vld [vmem:[%s716] sm:%s709]
            %719 = vst [vmem:[%s717] sm:%s709] %v718
          $region381: #{_elr_forward_impl.1} parent=375 // loop_footer
            %s715 = sadd.s32 1, %s711
          $region382: #{_elr_forward_impl.1} parent=375 // loop_footer_branch
            %710 = sbr.rel target = $region378
          $region383: #{_elr_forward_impl.1} parent=375 // loop_exit
            _
        $region376: #{_elr_forward_impl.1} parent=360 // pred_fallthru
          _
      $region361: #{_elr_forward_impl.1} parent=356 // pred_fallthru
        _
      // Predicated region
      $region362: #{_elr_forward_impl.1} parent=356 // pred_check
        %p683 = pneg %p679
      $region363: #{_elr_forward_impl.1} parent=356 // pred_check_branch
        %685 = sbr.rel (%p683) target = $region365
      $region364: #{_elr_forward_impl.1} parent=356 // pred_region
        %s686 = sshll.u32 1, 1
        %s687 = ssub.s32 %s686, 1
        loop: start=0, step=1, limit=1
        $region366: #{_elr_forward_impl.1} parent=364 // loop_pre_header
          _
        $region367: #{_elr_forward_impl.1} parent=364 // loop_header
          %s689 = sphi 0, %s693
          %p690 = scmp.ge.s32.totalorder %s689, 1
          %s694 = sphi [#allocation2], [#allocation2]
          %s695 = sphi %s677, %s677
        $region368: #{_elr_forward_impl.1} parent=364 // loop_header_branch
          %692 = sbr.rel (%p690) target = $region372
        $region369: #{_elr_forward_impl.1} parent=364 // loop_body
          %v696 = vld [vmem:[%s694] sm:%s687]
          %697 = vst [vmem:[%s695] sm:%s687] %v696
        $region370: #{_elr_forward_impl.1} parent=364 // loop_footer
          %s693 = sadd.s32 1, %s689
        $region371: #{_elr_forward_impl.1} parent=364 // loop_footer_branch
          %688 = sbr.rel target = $region367
        $region372: #{_elr_forward_impl.1} parent=364 // loop_exit
          _
      $region365: #{_elr_forward_impl.1} parent=356 // pred_fallthru
        _
      // Predicated region
      $region384: #{_elr_forward_impl.1} parent=356 // pred_check
        _
      $region385: #{_elr_forward_impl.1} parent=356 // pred_check_branch
        %722 = sbr.rel (0) target = $region387
      $region386: #{_elr_forward_impl.1} parent=356 // pred_region
        %723 = vsyncadd [#allocation3], 16
      $region387: #{_elr_forward_impl.1} parent=356 // pred_fallthru
        _
      %s724 = scalar_lea.vmem [#allocation2], 1
      %s725 = scalar_lea.vmem %s6, %s37
      %s726 = scalar_lea.sflag [#allocation3], 1
      %p728 = scmp.lt.u32.totalorder 1, 8
      %p729 = pneg %p728
      // Predicated region
      $region388: #{_elr_forward_impl.1} parent=356 // pred_check
        _
      $region389: #{_elr_forward_impl.1} parent=356 // pred_check_branch
        %731 = sbr.rel (%p728) target = $region391
      $region390: #{_elr_forward_impl.1} parent=356 // pred_region
        %s747 = sand.u32 1, 7
        %p748 = scmp.eq.s32.totalorder %s747, 0
        %p749 = pneg %p748
        // Predicated region
        $region403: #{_elr_forward_impl.1} parent=390 // pred_check
          _
        $region404: #{_elr_forward_impl.1} parent=390 // pred_check_branch
          %751 = sbr.rel (%p748) target = $region406
        $region405: #{_elr_forward_impl.1} parent=390 // pred_region
          %s752 = sand.u32 1, 7
          %s753 = ssub.s32 1, %s752
          %s754 = scalar_lea.vmem %s724, %s753 [#allocation2]
          %s755 = ssub.s32 1, %s752
          %s756 = scalar_lea.vmem %s725, %s755
          %s757 = sshll.u32 1, %s752
          %s758 = ssub.s32 %s757, 1
          loop: start=0, step=1, limit=1
          $region407: #{_elr_forward_impl.1} parent=405 // loop_pre_header
            _
          $region408: #{_elr_forward_impl.1} parent=405 // loop_header
            %s760 = sphi 0, %s764
            %p761 = scmp.ge.s32.totalorder %s760, 1
            %s765 = sphi %s754, %s754
            %s766 = sphi %s756, %s756
          $region409: #{_elr_forward_impl.1} parent=405 // loop_header_branch
            %763 = sbr.rel (%p761) target = $region413
          $region410: #{_elr_forward_impl.1} parent=405 // loop_body
            %v767 = vld [vmem:[%s765] sm:%s758]
            %768 = vst [vmem:[%s766] sm:%s758] %v767
          $region411: #{_elr_forward_impl.1} parent=405 // loop_footer
            %s764 = sadd.s32 1, %s760
          $region412: #{_elr_forward_impl.1} parent=405 // loop_footer_branch
            %759 = sbr.rel target = $region408
          $region413: #{_elr_forward_impl.1} parent=405 // loop_exit
            _
        $region406: #{_elr_forward_impl.1} parent=390 // pred_fallthru
          _
      $region391: #{_elr_forward_impl.1} parent=356 // pred_fallthru
        _
      // Predicated region
      $region392: #{_elr_forward_impl.1} parent=356 // pred_check
        %p732 = pneg %p728
      $region393: #{_elr_forward_impl.1} parent=356 // pred_check_branch
        %734 = sbr.rel (%p732) target = $region395
      $region394: #{_elr_forward_impl.1} parent=356 // pred_region
        %s735 = sshll.u32 1, 1
        %s736 = ssub.s32 %s735, 1
        loop: start=0, step=1, limit=1
        $region396: #{_elr_forward_impl.1} parent=394 // loop_pre_header
          _
        $region397: #{_elr_forward_impl.1} parent=394 // loop_header
          %s738 = sphi 0, %s742
          %p739 = scmp.ge.s32.totalorder %s738, 1
          %s743 = sphi %s724, %s724
          %s744 = sphi %s725, %s725
        $region398: #{_elr_forward_impl.1} parent=394 // loop_header_branch
          %741 = sbr.rel (%p739) target = $region402
        $region399: #{_elr_forward_impl.1} parent=394 // loop_body
          %v745 = vld [vmem:[%s743] sm:%s736]
          %746 = vst [vmem:[%s744] sm:%s736] %v745
        $region400: #{_elr_forward_impl.1} parent=394 // loop_footer
          %s742 = sadd.s32 1, %s738
        $region401: #{_elr_forward_impl.1} parent=394 // loop_footer_branch
          %737 = sbr.rel target = $region397
        $region402: #{_elr_forward_impl.1} parent=394 // loop_exit
          _
      $region395: #{_elr_forward_impl.1} parent=356 // pred_fallthru
        _
      // Predicated region
      $region414: #{_elr_forward_impl.1} parent=356 // pred_check
        _
      $region415: #{_elr_forward_impl.1} parent=356 // pred_check_branch
        %771 = sbr.rel (0) target = $region417
      $region416: #{_elr_forward_impl.1} parent=356 // pred_region
        %772 = vsyncadd %s726, 16
      $region417: #{_elr_forward_impl.1} parent=356 // pred_fallthru
        _
      %s773 = scalar_lea.vmem [#allocation2], 2
      %s774 = scalar_lea.vmem %s6, %s38
      %s775 = scalar_lea.sflag [#allocation3], 2
      %p777 = scmp.lt.u32.totalorder 1, 8
      %p778 = pneg %p777
      // Predicated region
      $region418: #{_elr_forward_impl.1} parent=356 // pred_check
        _
      $region419: #{_elr_forward_impl.1} parent=356 // pred_check_branch
        %780 = sbr.rel (%p777) target = $region421
      $region420: #{_elr_forward_impl.1} parent=356 // pred_region
        %s796 = sand.u32 1, 7
        %p797 = scmp.eq.s32.totalorder %s796, 0
        %p798 = pneg %p797
        // Predicated region
        $region433: #{_elr_forward_impl.1} parent=420 // pred_check
          _
        $region434: #{_elr_forward_impl.1} parent=420 // pred_check_branch
          %800 = sbr.rel (%p797) target = $region436
        $region435: #{_elr_forward_impl.1} parent=420 // pred_region
          %s801 = sand.u32 1, 7
          %s802 = ssub.s32 1, %s801
          %s803 = scalar_lea.vmem %s773, %s802 [#allocation2]
          %s804 = ssub.s32 1, %s801
          %s805 = scalar_lea.vmem %s774, %s804
          %s806 = sshll.u32 1, %s801
          %s807 = ssub.s32 %s806, 1
          loop: start=0, step=1, limit=1
          $region437: #{_elr_forward_impl.1} parent=435 // loop_pre_header
            _
          $region438: #{_elr_forward_impl.1} parent=435 // loop_header
            %s809 = sphi 0, %s813
            %p810 = scmp.ge.s32.totalorder %s809, 1
            %s814 = sphi %s803, %s803
            %s815 = sphi %s805, %s805
          $region439: #{_elr_forward_impl.1} parent=435 // loop_header_branch
            %812 = sbr.rel (%p810) target = $region443
          $region440: #{_elr_forward_impl.1} parent=435 // loop_body
            %v816 = vld [vmem:[%s814] sm:%s807]
            %817 = vst [vmem:[%s815] sm:%s807] %v816
          $region441: #{_elr_forward_impl.1} parent=435 // loop_footer
            %s813 = sadd.s32 1, %s809
          $region442: #{_elr_forward_impl.1} parent=435 // loop_footer_branch
            %808 = sbr.rel target = $region438
          $region443: #{_elr_forward_impl.1} parent=435 // loop_exit
            _
        $region436: #{_elr_forward_impl.1} parent=420 // pred_fallthru
          _
      $region421: #{_elr_forward_impl.1} parent=356 // pred_fallthru
        _
      // Predicated region
      $region422: #{_elr_forward_impl.1} parent=356 // pred_check
        %p781 = pneg %p777
      $region423: #{_elr_forward_impl.1} parent=356 // pred_check_branch
        %783 = sbr.rel (%p781) target = $region425
      $region424: #{_elr_forward_impl.1} parent=356 // pred_region
        %s784 = sshll.u32 1, 1
        %s785 = ssub.s32 %s784, 1
        loop: start=0, step=1, limit=1
        $region426: #{_elr_forward_impl.1} parent=424 // loop_pre_header
          _
        $region427: #{_elr_forward_impl.1} parent=424 // loop_header
          %s787 = sphi 0, %s791
          %p788 = scmp.ge.s32.totalorder %s787, 1
          %s792 = sphi %s773, %s773
          %s793 = sphi %s774, %s774
        $region428: #{_elr_forward_impl.1} parent=424 // loop_header_branch
          %790 = sbr.rel (%p788) target = $region432
        $region429: #{_elr_forward_impl.1} parent=424 // loop_body
          %v794 = vld [vmem:[%s792] sm:%s785]
          %795 = vst [vmem:[%s793] sm:%s785] %v794
        $region430: #{_elr_forward_impl.1} parent=424 // loop_footer
          %s791 = sadd.s32 1, %s787
        $region431: #{_elr_forward_impl.1} parent=424 // loop_footer_branch
          %786 = sbr.rel target = $region427
        $region432: #{_elr_forward_impl.1} parent=424 // loop_exit
          _
      $region425: #{_elr_forward_impl.1} parent=356 // pred_fallthru
        _
      // Predicated region
      $region444: #{_elr_forward_impl.1} parent=356 // pred_check
        _
      $region445: #{_elr_forward_impl.1} parent=356 // pred_check_branch
        %820 = sbr.rel (0) target = $region447
      $region446: #{_elr_forward_impl.1} parent=356 // pred_region
        %821 = vsyncadd %s775, 16
      $region447: #{_elr_forward_impl.1} parent=356 // pred_fallthru
        _
      %s822 = scalar_lea.vmem [#allocation2], 3
      %s823 = scalar_lea.vmem %s6, %s39
      %s824 = scalar_lea.sflag [#allocation3], 3
      %p826 = scmp.lt.u32.totalorder 1, 8
      %p827 = pneg %p826
      // Predicated region
      $region448: #{_elr_forward_impl.1} parent=356 // pred_check
        _
      $region449: #{_elr_forward_impl.1} parent=356 // pred_check_branch
        %829 = sbr.rel (%p826) target = $region451
      $region450: #{_elr_forward_impl.1} parent=356 // pred_region
        %s845 = sand.u32 1, 7
        %p846 = scmp.eq.s32.totalorder %s845, 0
        %p847 = pneg %p846
        // Predicated region
        $region463: #{_elr_forward_impl.1} parent=450 // pred_check
          _
        $region464: #{_elr_forward_impl.1} parent=450 // pred_check_branch
          %849 = sbr.rel (%p846) target = $region466
        $region465: #{_elr_forward_impl.1} parent=450 // pred_region
          %s850 = sand.u32 1, 7
          %s851 = ssub.s32 1, %s850
          %s852 = scalar_lea.vmem %s822, %s851 [#allocation2]
          %s853 = ssub.s32 1, %s850
          %s854 = scalar_lea.vmem %s823, %s853
          %s855 = sshll.u32 1, %s850
          %s856 = ssub.s32 %s855, 1
          loop: start=0, step=1, limit=1
          $region467: #{_elr_forward_impl.1} parent=465 // loop_pre_header
            _
          $region468: #{_elr_forward_impl.1} parent=465 // loop_header
            %s858 = sphi 0, %s862
            %p859 = scmp.ge.s32.totalorder %s858, 1
            %s863 = sphi %s852, %s852
            %s864 = sphi %s854, %s854
          $region469: #{_elr_forward_impl.1} parent=465 // loop_header_branch
            %861 = sbr.rel (%p859) target = $region473
          $region470: #{_elr_forward_impl.1} parent=465 // loop_body
            %v865 = vld [vmem:[%s863] sm:%s856]
            %866 = vst [vmem:[%s864] sm:%s856] %v865
          $region471: #{_elr_forward_impl.1} parent=465 // loop_footer
            %s862 = sadd.s32 1, %s858
          $region472: #{_elr_forward_impl.1} parent=465 // loop_footer_branch
            %857 = sbr.rel target = $region468
          $region473: #{_elr_forward_impl.1} parent=465 // loop_exit
            _
        $region466: #{_elr_forward_impl.1} parent=450 // pred_fallthru
          _
      $region451: #{_elr_forward_impl.1} parent=356 // pred_fallthru
        _
      // Predicated region
      $region452: #{_elr_forward_impl.1} parent=356 // pred_check
        %p830 = pneg %p826
      $region453: #{_elr_forward_impl.1} parent=356 // pred_check_branch
        %832 = sbr.rel (%p830) target = $region455
      $region454: #{_elr_forward_impl.1} parent=356 // pred_region
        %s833 = sshll.u32 1, 1
        %s834 = ssub.s32 %s833, 1
        loop: start=0, step=1, limit=1
        $region456: #{_elr_forward_impl.1} parent=454 // loop_pre_header
          _
        $region457: #{_elr_forward_impl.1} parent=454 // loop_header
          %s836 = sphi 0, %s840
          %p837 = scmp.ge.s32.totalorder %s836, 1
          %s841 = sphi %s822, %s822
          %s842 = sphi %s823, %s823
        $region458: #{_elr_forward_impl.1} parent=454 // loop_header_branch
          %839 = sbr.rel (%p837) target = $region462
        $region459: #{_elr_forward_impl.1} parent=454 // loop_body
          %v843 = vld [vmem:[%s841] sm:%s834]
          %844 = vst [vmem:[%s842] sm:%s834] %v843
        $region460: #{_elr_forward_impl.1} parent=454 // loop_footer
          %s840 = sadd.s32 1, %s836
        $region461: #{_elr_forward_impl.1} parent=454 // loop_footer_branch
          %835 = sbr.rel target = $region457
        $region462: #{_elr_forward_impl.1} parent=454 // loop_exit
          _
      $region455: #{_elr_forward_impl.1} parent=356 // pred_fallthru
        _
      // Predicated region
      $region474: #{_elr_forward_impl.1} parent=356 // pred_check
        _
      $region475: #{_elr_forward_impl.1} parent=356 // pred_check_branch
        %869 = sbr.rel (0) target = $region477
      $region476: #{_elr_forward_impl.1} parent=356 // pred_region
        %870 = vsyncadd %s824, 16
      $region477: #{_elr_forward_impl.1} parent=356 // pred_fallthru
        _
      %s871 = scalar_lea.vmem [#allocation2], 4
      %s872 = scalar_lea.vmem %s6, %s40
      %s873 = scalar_lea.sflag [#allocation3], 4
      %p875 = scmp.lt.u32.totalorder 1, 8
      %p876 = pneg %p875
      // Predicated region
      $region478: #{_elr_forward_impl.1} parent=356 // pred_check
        _
      $region479: #{_elr_forward_impl.1} parent=356 // pred_check_branch
        %878 = sbr.rel (%p875) target = $region481
      $region480: #{_elr_forward_impl.1} parent=356 // pred_region
        %s894 = sand.u32 1, 7
        %p895 = scmp.eq.s32.totalorder %s894, 0
        %p896 = pneg %p895
        // Predicated region
        $region493: #{_elr_forward_impl.1} parent=480 // pred_check
          _
        $region494: #{_elr_forward_impl.1} parent=480 // pred_check_branch
          %898 = sbr.rel (%p895) target = $region496
        $region495: #{_elr_forward_impl.1} parent=480 // pred_region
          %s899 = sand.u32 1, 7
          %s900 = ssub.s32 1, %s899
          %s901 = scalar_lea.vmem %s871, %s900 [#allocation2]
          %s902 = ssub.s32 1, %s899
          %s903 = scalar_lea.vmem %s872, %s902
          %s904 = sshll.u32 1, %s899
          %s905 = ssub.s32 %s904, 1
          loop: start=0, step=1, limit=1
          $region497: #{_elr_forward_impl.1} parent=495 // loop_pre_header
            _
          $region498: #{_elr_forward_impl.1} parent=495 // loop_header
            %s907 = sphi 0, %s911
            %p908 = scmp.ge.s32.totalorder %s907, 1
            %s912 = sphi %s901, %s901
            %s913 = sphi %s903, %s903
          $region499: #{_elr_forward_impl.1} parent=495 // loop_header_branch
            %910 = sbr.rel (%p908) target = $region503
          $region500: #{_elr_forward_impl.1} parent=495 // loop_body
            %v914 = vld [vmem:[%s912] sm:%s905]
            %915 = vst [vmem:[%s913] sm:%s905] %v914
          $region501: #{_elr_forward_impl.1} parent=495 // loop_footer
            %s911 = sadd.s32 1, %s907
          $region502: #{_elr_forward_impl.1} parent=495 // loop_footer_branch
            %906 = sbr.rel target = $region498
          $region503: #{_elr_forward_impl.1} parent=495 // loop_exit
            _
        $region496: #{_elr_forward_impl.1} parent=480 // pred_fallthru
          _
      $region481: #{_elr_forward_impl.1} parent=356 // pred_fallthru
        _
      // Predicated region
      $region482: #{_elr_forward_impl.1} parent=356 // pred_check
        %p879 = pneg %p875
      $region483: #{_elr_forward_impl.1} parent=356 // pred_check_branch
        %881 = sbr.rel (%p879) target = $region485
      $region484: #{_elr_forward_impl.1} parent=356 // pred_region
        %s882 = sshll.u32 1, 1
        %s883 = ssub.s32 %s882, 1
        loop: start=0, step=1, limit=1
        $region486: #{_elr_forward_impl.1} parent=484 // loop_pre_header
          _
        $region487: #{_elr_forward_impl.1} parent=484 // loop_header
          %s885 = sphi 0, %s889
          %p886 = scmp.ge.s32.totalorder %s885, 1
          %s890 = sphi %s871, %s871
          %s891 = sphi %s872, %s872
        $region488: #{_elr_forward_impl.1} parent=484 // loop_header_branch
          %888 = sbr.rel (%p886) target = $region492
        $region489: #{_elr_forward_impl.1} parent=484 // loop_body
          %v892 = vld [vmem:[%s890] sm:%s883]
          %893 = vst [vmem:[%s891] sm:%s883] %v892
        $region490: #{_elr_forward_impl.1} parent=484 // loop_footer
          %s889 = sadd.s32 1, %s885
        $region491: #{_elr_forward_impl.1} parent=484 // loop_footer_branch
          %884 = sbr.rel target = $region487
        $region492: #{_elr_forward_impl.1} parent=484 // loop_exit
          _
      $region485: #{_elr_forward_impl.1} parent=356 // pred_fallthru
        _
      // Predicated region
      $region504: #{_elr_forward_impl.1} parent=356 // pred_check
        _
      $region505: #{_elr_forward_impl.1} parent=356 // pred_check_branch
        %918 = sbr.rel (0) target = $region507
      $region506: #{_elr_forward_impl.1} parent=356 // pred_region
        %919 = vsyncadd %s873, 16
      $region507: #{_elr_forward_impl.1} parent=356 // pred_fallthru
        _
      %s920 = scalar_lea.vmem [#allocation2], 5
      %s921 = scalar_lea.vmem %s6, %s41
      %s922 = scalar_lea.sflag [#allocation3], 5
      %p924 = scmp.lt.u32.totalorder 1, 8
      %p925 = pneg %p924
      // Predicated region
      $region508: #{_elr_forward_impl.1} parent=356 // pred_check
        _
      $region509: #{_elr_forward_impl.1} parent=356 // pred_check_branch
        %927 = sbr.rel (%p924) target = $region511
      $region510: #{_elr_forward_impl.1} parent=356 // pred_region
        %s943 = sand.u32 1, 7
        %p944 = scmp.eq.s32.totalorder %s943, 0
        %p945 = pneg %p944
        // Predicated region
        $region523: #{_elr_forward_impl.1} parent=510 // pred_check
          _
        $region524: #{_elr_forward_impl.1} parent=510 // pred_check_branch
          %947 = sbr.rel (%p944) target = $region526
        $region525: #{_elr_forward_impl.1} parent=510 // pred_region
          %s948 = sand.u32 1, 7
          %s949 = ssub.s32 1, %s948
          %s950 = scalar_lea.vmem %s920, %s949 [#allocation2]
          %s951 = ssub.s32 1, %s948
          %s952 = scalar_lea.vmem %s921, %s951
          %s953 = sshll.u32 1, %s948
          %s954 = ssub.s32 %s953, 1
          loop: start=0, step=1, limit=1
          $region527: #{_elr_forward_impl.1} parent=525 // loop_pre_header
            _
          $region528: #{_elr_forward_impl.1} parent=525 // loop_header
            %s956 = sphi 0, %s960
            %p957 = scmp.ge.s32.totalorder %s956, 1
            %s961 = sphi %s950, %s950
            %s962 = sphi %s952, %s952
          $region529: #{_elr_forward_impl.1} parent=525 // loop_header_branch
            %959 = sbr.rel (%p957) target = $region533
          $region530: #{_elr_forward_impl.1} parent=525 // loop_body
            %v963 = vld [vmem:[%s961] sm:%s954]
            %964 = vst [vmem:[%s962] sm:%s954] %v963
          $region531: #{_elr_forward_impl.1} parent=525 // loop_footer
            %s960 = sadd.s32 1, %s956
          $region532: #{_elr_forward_impl.1} parent=525 // loop_footer_branch
            %955 = sbr.rel target = $region528
          $region533: #{_elr_forward_impl.1} parent=525 // loop_exit
            _
        $region526: #{_elr_forward_impl.1} parent=510 // pred_fallthru
          _
      $region511: #{_elr_forward_impl.1} parent=356 // pred_fallthru
        _
      // Predicated region
      $region512: #{_elr_forward_impl.1} parent=356 // pred_check
        %p928 = pneg %p924
      $region513: #{_elr_forward_impl.1} parent=356 // pred_check_branch
        %930 = sbr.rel (%p928) target = $region515
      $region514: #{_elr_forward_impl.1} parent=356 // pred_region
        %s931 = sshll.u32 1, 1
        %s932 = ssub.s32 %s931, 1
        loop: start=0, step=1, limit=1
        $region516: #{_elr_forward_impl.1} parent=514 // loop_pre_header
          _
        $region517: #{_elr_forward_impl.1} parent=514 // loop_header
          %s934 = sphi 0, %s938
          %p935 = scmp.ge.s32.totalorder %s934, 1
          %s939 = sphi %s920, %s920
          %s940 = sphi %s921, %s921
        $region518: #{_elr_forward_impl.1} parent=514 // loop_header_branch
          %937 = sbr.rel (%p935) target = $region522
        $region519: #{_elr_forward_impl.1} parent=514 // loop_body
          %v941 = vld [vmem:[%s939] sm:%s932]
          %942 = vst [vmem:[%s940] sm:%s932] %v941
        $region520: #{_elr_forward_impl.1} parent=514 // loop_footer
          %s938 = sadd.s32 1, %s934
        $region521: #{_elr_forward_impl.1} parent=514 // loop_footer_branch
          %933 = sbr.rel target = $region517
        $region522: #{_elr_forward_impl.1} parent=514 // loop_exit
          _
      $region515: #{_elr_forward_impl.1} parent=356 // pred_fallthru
        _
      // Predicated region
      $region534: #{_elr_forward_impl.1} parent=356 // pred_check
        _
      $region535: #{_elr_forward_impl.1} parent=356 // pred_check_branch
        %967 = sbr.rel (0) target = $region537
      $region536: #{_elr_forward_impl.1} parent=356 // pred_region
        %968 = vsyncadd %s922, 16
      $region537: #{_elr_forward_impl.1} parent=356 // pred_fallthru
        _
      %s969 = scalar_lea.vmem [#allocation2], 6
      %s970 = scalar_lea.vmem %s6, %s42
      %s971 = scalar_lea.sflag [#allocation3], 6
      %p973 = scmp.lt.u32.totalorder 1, 8
      %p974 = pneg %p973
      // Predicated region
      $region538: #{_elr_forward_impl.1} parent=356 // pred_check
        _
      $region539: #{_elr_forward_impl.1} parent=356 // pred_check_branch
        %976 = sbr.rel (%p973) target = $region541
      $region540: #{_elr_forward_impl.1} parent=356 // pred_region
        %s992 = sand.u32 1, 7
        %p993 = scmp.eq.s32.totalorder %s992, 0
        %p994 = pneg %p993
        // Predicated region
        $region553: #{_elr_forward_impl.1} parent=540 // pred_check
          _
        $region554: #{_elr_forward_impl.1} parent=540 // pred_check_branch
          %996 = sbr.rel (%p993) target = $region556
        $region555: #{_elr_forward_impl.1} parent=540 // pred_region
          %s997 = sand.u32 1, 7
          %s998 = ssub.s32 1, %s997
          %s999 = scalar_lea.vmem %s969, %s998 [#allocation2]
          %s1000 = ssub.s32 1, %s997
          %s1001 = scalar_lea.vmem %s970, %s1000
          %s1002 = sshll.u32 1, %s997
          %s1003 = ssub.s32 %s1002, 1
          loop: start=0, step=1, limit=1
          $region557: #{_elr_forward_impl.1} parent=555 // loop_pre_header
            _
          $region558: #{_elr_forward_impl.1} parent=555 // loop_header
            %s1005 = sphi 0, %s1009
            %p1006 = scmp.ge.s32.totalorder %s1005, 1
            %s1010 = sphi %s999, %s999
            %s1011 = sphi %s1001, %s1001
          $region559: #{_elr_forward_impl.1} parent=555 // loop_header_branch
            %1008 = sbr.rel (%p1006) target = $region563
          $region560: #{_elr_forward_impl.1} parent=555 // loop_body
            %v1012 = vld [vmem:[%s1010] sm:%s1003]
            %1013 = vst [vmem:[%s1011] sm:%s1003] %v1012
          $region561: #{_elr_forward_impl.1} parent=555 // loop_footer
            %s1009 = sadd.s32 1, %s1005
          $region562: #{_elr_forward_impl.1} parent=555 // loop_footer_branch
            %1004 = sbr.rel target = $region558
          $region563: #{_elr_forward_impl.1} parent=555 // loop_exit
            _
        $region556: #{_elr_forward_impl.1} parent=540 // pred_fallthru
          _
      $region541: #{_elr_forward_impl.1} parent=356 // pred_fallthru
        _
      // Predicated region
      $region542: #{_elr_forward_impl.1} parent=356 // pred_check
        %p977 = pneg %p973
      $region543: #{_elr_forward_impl.1} parent=356 // pred_check_branch
        %979 = sbr.rel (%p977) target = $region545
      $region544: #{_elr_forward_impl.1} parent=356 // pred_region
        %s980 = sshll.u32 1, 1
        %s981 = ssub.s32 %s980, 1
        loop: start=0, step=1, limit=1
        $region546: #{_elr_forward_impl.1} parent=544 // loop_pre_header
          _
        $region547: #{_elr_forward_impl.1} parent=544 // loop_header
          %s983 = sphi 0, %s987
          %p984 = scmp.ge.s32.totalorder %s983, 1
          %s988 = sphi %s969, %s969
          %s989 = sphi %s970, %s970
        $region548: #{_elr_forward_impl.1} parent=544 // loop_header_branch
          %986 = sbr.rel (%p984) target = $region552
        $region549: #{_elr_forward_impl.1} parent=544 // loop_body
          %v990 = vld [vmem:[%s988] sm:%s981]
          %991 = vst [vmem:[%s989] sm:%s981] %v990
        $region550: #{_elr_forward_impl.1} parent=544 // loop_footer
          %s987 = sadd.s32 1, %s983
        $region551: #{_elr_forward_impl.1} parent=544 // loop_footer_branch
          %982 = sbr.rel target = $region547
        $region552: #{_elr_forward_impl.1} parent=544 // loop_exit
          _
      $region545: #{_elr_forward_impl.1} parent=356 // pred_fallthru
        _
      // Predicated region
      $region564: #{_elr_forward_impl.1} parent=356 // pred_check
        _
      $region565: #{_elr_forward_impl.1} parent=356 // pred_check_branch
        %1016 = sbr.rel (0) target = $region567
      $region566: #{_elr_forward_impl.1} parent=356 // pred_region
        %1017 = vsyncadd %s971, 16
      $region567: #{_elr_forward_impl.1} parent=356 // pred_fallthru
        _
      %s1018 = scalar_lea.vmem [#allocation2], 7
      %s1019 = scalar_lea.vmem %s6, %s43
      %s1020 = scalar_lea.sflag [#allocation3], 7
      %p1022 = scmp.lt.u32.totalorder 1, 8
      %p1023 = pneg %p1022
      // Predicated region
      $region568: #{_elr_forward_impl.1} parent=356 // pred_check
        _
      $region569: #{_elr_forward_impl.1} parent=356 // pred_check_branch
        %1025 = sbr.rel (%p1022) target = $region571
      $region570: #{_elr_forward_impl.1} parent=356 // pred_region
        %s1041 = sand.u32 1, 7
        %p1042 = scmp.eq.s32.totalorder %s1041, 0
        %p1043 = pneg %p1042
        // Predicated region
        $region583: #{_elr_forward_impl.1} parent=570 // pred_check
          _
        $region584: #{_elr_forward_impl.1} parent=570 // pred_check_branch
          %1045 = sbr.rel (%p1042) target = $region586
        $region585: #{_elr_forward_impl.1} parent=570 // pred_region
          %s1046 = sand.u32 1, 7
          %s1047 = ssub.s32 1, %s1046
          %s1048 = scalar_lea.vmem %s1018, %s1047 [#allocation2]
          %s1049 = ssub.s32 1, %s1046
          %s1050 = scalar_lea.vmem %s1019, %s1049
          %s1051 = sshll.u32 1, %s1046
          %s1052 = ssub.s32 %s1051, 1
          loop: start=0, step=1, limit=1
          $region587: #{_elr_forward_impl.1} parent=585 // loop_pre_header
            _
          $region588: #{_elr_forward_impl.1} parent=585 // loop_header
            %s1054 = sphi 0, %s1058
            %p1055 = scmp.ge.s32.totalorder %s1054, 1
            %s1059 = sphi %s1048, %s1048
            %s1060 = sphi %s1050, %s1050
          $region589: #{_elr_forward_impl.1} parent=585 // loop_header_branch
            %1057 = sbr.rel (%p1055) target = $region593
          $region590: #{_elr_forward_impl.1} parent=585 // loop_body
            %v1061 = vld [vmem:[%s1059] sm:%s1052]
            %1062 = vst [vmem:[%s1060] sm:%s1052] %v1061
          $region591: #{_elr_forward_impl.1} parent=585 // loop_footer
            %s1058 = sadd.s32 1, %s1054
          $region592: #{_elr_forward_impl.1} parent=585 // loop_footer_branch
            %1053 = sbr.rel target = $region588
          $region593: #{_elr_forward_impl.1} parent=585 // loop_exit
            _
        $region586: #{_elr_forward_impl.1} parent=570 // pred_fallthru
          _
      $region571: #{_elr_forward_impl.1} parent=356 // pred_fallthru
        _
      // Predicated region
      $region572: #{_elr_forward_impl.1} parent=356 // pred_check
        %p1026 = pneg %p1022
      $region573: #{_elr_forward_impl.1} parent=356 // pred_check_branch
        %1028 = sbr.rel (%p1026) target = $region575
      $region574: #{_elr_forward_impl.1} parent=356 // pred_region
        %s1029 = sshll.u32 1, 1
        %s1030 = ssub.s32 %s1029, 1
        loop: start=0, step=1, limit=1
        $region576: #{_elr_forward_impl.1} parent=574 // loop_pre_header
          _
        $region577: #{_elr_forward_impl.1} parent=574 // loop_header
          %s1032 = sphi 0, %s1036
          %p1033 = scmp.ge.s32.totalorder %s1032, 1
          %s1037 = sphi %s1018, %s1018
          %s1038 = sphi %s1019, %s1019
        $region578: #{_elr_forward_impl.1} parent=574 // loop_header_branch
          %1035 = sbr.rel (%p1033) target = $region582
        $region579: #{_elr_forward_impl.1} parent=574 // loop_body
          %v1039 = vld [vmem:[%s1037] sm:%s1030]
          %1040 = vst [vmem:[%s1038] sm:%s1030] %v1039
        $region580: #{_elr_forward_impl.1} parent=574 // loop_footer
          %s1036 = sadd.s32 1, %s1032
        $region581: #{_elr_forward_impl.1} parent=574 // loop_footer_branch
          %1031 = sbr.rel target = $region577
        $region582: #{_elr_forward_impl.1} parent=574 // loop_exit
          _
      $region575: #{_elr_forward_impl.1} parent=356 // pred_fallthru
        _
      // Predicated region
      $region594: #{_elr_forward_impl.1} parent=356 // pred_check
        _
      $region595: #{_elr_forward_impl.1} parent=356 // pred_check_branch
        %1065 = sbr.rel (0) target = $region597
      $region596: #{_elr_forward_impl.1} parent=356 // pred_region
        %1066 = vsyncadd %s1020, 16
      $region597: #{_elr_forward_impl.1} parent=356 // pred_fallthru
        _
    $region357: #{_elr_forward_impl.1} parent=1 // pred_fallthru
      _
    %v1067 = vmul.f32 %v626, %v543
    %v1068 = vsel %vm530, %v1067, 0.0
    %1069 = vadd.xlane.f32.xlu0 %v1068
    %v1070 = vpop.xlane.xlu0 %1069
    %v1071 = vmul.f32 %v626, %v526
    %v1072 = vsel %vm530, %v1071, 0.0
    %1073 = vadd.xlane.f32.xlu0 %v1072
    %v1074 = vpop.xlane.xlu0 %1073
    %v1075 = vsub.f32 1.0, %v1070
    %v1076 = vrcp.pop %v1075
    %v1077 = vmul.f32 1.0, %v1076
    %v1078 = vsub.f32 %v552, %v529
    %v1079 = vmul.f32 %v552, 3.0
    %v1080 = vmul.f32 %v1079, %v1077
    %v1081 = vmul.f32 %v1074, %v552
    %v1082 = vsub.f32 %v1070, %v1081
    %v1083 = vmul.f32 %v1080, %v1082
    %v1084 = vadd.f32 %v1078, %v1083
    %v1085 = vand.u32 2147483647, %v1084
    %v1086 = vsel %vm568, %v1085, 0.0
    %v1087 = vrot.slane %v1086, 4
    %v1088 = vadd.f32 %v1086, %v1087
    %v1089 = vrot.slane %v1088, 2
    %v1090 = vadd.f32 %v1088, %v1089
    %v1091 = vrot.slane %v1090, 1
    %v1092 = vadd.f32 %v1090, %v1091
    %v1093 = vmul.f32 %v1092, 0.125
    %v1094 = vmul.f32 %v1085, %v510
    %v1095 = vsel %vm568, %v1094, 0.0
    %v1096 = vrot.slane %v1095, 4
    %v1097 = vadd.f32 %v1095, %v1096
    %v1098 = vrot.slane %v1097, 2
    %v1099 = vadd.f32 %v1097, %v1098
    %v1100 = vrot.slane %v1099, 1
    %v1101 = vadd.f32 %v1099, %v1100
    %v1102 = vmul.f32 %v1085, %v1085
    %v1103 = vsel %vm568, %v1102, 0.0
    %v1104 = vrot.slane %v1103, 4
    %v1105 = vadd.f32 %v1103, %v1104
    %v1106 = vrot.slane %v1105, 2
    %v1107 = vadd.f32 %v1105, %v1106
    %v1108 = vrot.slane %v1107, 1
    %v1109 = vadd.f32 %v1107, %v1108
    %v1110 = vrsqrt.pop %v1109
    %v1111 = vmul.f32 %v1109, %v1110
    %vm1112 = vcmp.eq.f32.partialorder %v1109, inf
    %v1113 = vsel %vm1112, %v1109, %v1111
    %vm1114 = vcmp.eq.f32.partialorder %v1109, 0.0
    %v1115 = vand.u32 %v1109, 2147483648
    %v1116 = vsel %vm1114, %v1115, %v1113
    %v1117 = vmul.f32 %v1116, %v590
    %v1118 = vmax.f32 %v1117, 1e-08
    %v1119 = vrcp.pop %v1118
    %v1120 = vmul.f32 %v1101, %v1119
    %v1121 = vand.u32 2147483647, %v1093
    %v1122 = vmul.f32 %v1121, 2.828427
    %v1123 = vmul.f32 %v1093, %v575
    %v1124 = vmul.f32 %v1122, %v590
    %v1125 = vmax.f32 %v1124, 1e-08
    %v1126 = vrcp.pop %v1125
    %v1127 = vmul.f32 %v1123, %v1126
    %v1128 = vsub.f32 %v1120, %v1127
    %v1129 = vsub.f32 %v1101, %v1123
    %v1130 = vlog2.pop %v1075
    %v1131 = vmul.f32 %v1130, 0.6931472
    %v1132 = vrot.slane %v1131, 4
    %v1133 = vadd.f32 %v1131, %v1132
    %v1134 = vrot.slane %v1133, 2
    %v1135 = vadd.f32 %v1133, %v1134
    %v1136 = vrot.slane %v1135, 1
    %v1137 = vadd.f32 %v1135, %v1136
    %v1138 = vmul.f32 %v1137, 0.125
    %v1139 = vmul.f32 %v1138, 3.0
    %v1140 = vadd.f32 %v567, %v1139
    %vm1141 = vcmp.eq.s32.totalorder %v512, 0
    %vm1142 = vcmp.eq.s32.totalorder %v512, 1
    %1144 = vset.pattern.permute.xlu0 0
    %1145 = vperm.xlu0 %1144, %v1128
    %v1146 = vpop.permute.xlu0 %1145
    %1149 = vset.pattern.permute.xlu0 0
    %1150 = vperm.xlu0 %1149, %v1129
    %v1151 = vpop.permute.xlu0 %1150
    %v1153 = vsel %vm1142, %v1146, %v1151
    %v1154 = vsel %vm1141, %v1140, %v1153
    %vm1155 = vcmask 16384
    %1156 = vst.msk [vmem:[%s7] sm:$0x1] %vm1155, %v1154
    // Predicated region
    $region598: #{_elr_forward_impl.1} parent=1 // pred_check
      _
    $region599: #{_elr_forward_impl.1} parent=1 // pred_check_branch
      %1158 = sbr.rel (%p68) target = $region601
    $region600: #{_elr_forward_impl.1} parent=1 // pred_region
      %s1159 = smul.u32 8, 1
      %s1160 = sshll.u32 %s1159, 4
      %1161 = dma.done [#allocation3], %s1160
    $region601: #{_elr_forward_impl.1} parent=1 // pred_fallthru
      _
    // Predicated region
    $region602: #{_elr_forward_impl.1} parent=1 // pred_check
      %p1162 = pneg %p68
    $region603: #{_elr_forward_impl.1} parent=1 // pred_check_branch
      %1164 = sbr.rel (%p1162) target = $region605
    $region604: #{_elr_forward_impl.1} parent=1 // pred_region
      %s1165 = smul.u32 1, 1
      %s1166 = sshll.u32 %s1165, 4
      %1167 = dma.done [#allocation3], %s1166
      %s1168 = scalar_lea.sflag [#allocation3], 1
      %s1169 = sshll.u32 %s1165, 4
      %1170 = dma.done %s1168, %s1169
      %s1171 = scalar_lea.sflag [#allocation3], 2
      %s1172 = sshll.u32 %s1165, 4
      %1173 = dma.done %s1171, %s1172
      %s1174 = scalar_lea.sflag [#allocation3], 3
      %s1175 = sshll.u32 %s1165, 4
      %1176 = dma.done %s1174, %s1175
      %s1177 = scalar_lea.sflag [#allocation3], 4
      %s1178 = sshll.u32 %s1165, 4
      %1179 = dma.done %s1177, %s1178
      %s1180 = scalar_lea.sflag [#allocation3], 5
      %s1181 = sshll.u32 %s1165, 4
      %1182 = dma.done %s1180, %s1181
      %s1183 = scalar_lea.sflag [#allocation3], 6
      %s1184 = sshll.u32 %s1165, 4
      %1185 = dma.done %s1183, %s1184
      %s1186 = scalar_lea.sflag [#allocation3], 7
      %s1187 = sshll.u32 %s1165, 4
      %1188 = dma.done %s1186, %s1187
    $region605: #{_elr_forward_impl.1} parent=1 // pred_fallthru
      _
    // Predicated region
    $region606: #{_elr_forward_impl.1} parent=1 // pred_check
      _
    $region607: #{_elr_forward_impl.1} parent=1 // pred_check_branch
      %1190 = sbr.rel (0) target = $region609
    $region608: #{_elr_forward_impl.1} parent=1 // pred_region
      _
    $region609: #{_elr_forward_impl.1} parent=1 // pred_fallthru
      _
    // Predicated region
    $region610: #{_elr_forward_impl.1} parent=1 // pred_check
      _
    $region611: #{_elr_forward_impl.1} parent=1 // pred_check_branch
      %1192 = sbr.rel (0) target = $region613
    $region612: #{_elr_forward_impl.1} parent=1 // pred_region
      _
    $region613: #{_elr_forward_impl.1} parent=1 // pred_fallthru
      _
    %1193 = vsyncpa [#allocation5], 1
  %1194 = vsyncmov [#allocation3]
  %s1195 = vpop.sfrf %1194
  %p1196 = scmp.eq.s32.totalorder %s1195, 0
  %p1197 = pneg %p1196
  %1199 = shalt.err (%p1197)
  %s1200 = scalar_lea.sflag [#allocation3], 1
  %1201 = vsyncmov %s1200
  %s1202 = vpop.sfrf %1201
  %p1203 = scmp.eq.s32.totalorder %s1202, 0
  %p1204 = pneg %p1203
  %1206 = shalt.err (%p1204)
  %s1207 = scalar_lea.sflag [#allocation3], 2
  %1208 = vsyncmov %s1207
  %s1209 = vpop.sfrf %1208
  %p1210 = scmp.eq.s32.totalorder %s1209, 0
  %p1211 = pneg %p1210
  %1213 = shalt.err (%p1211)
  %s1214 = scalar_lea.sflag [#allocation3], 3
  %1215 = vsyncmov %s1214
  %s1216 = vpop.sfrf %1215
  %p1217 = scmp.eq.s32.totalorder %s1216, 0
  %p1218 = pneg %p1217
  %1220 = shalt.err (%p1218)
  %s1221 = scalar_lea.sflag [#allocation3], 4
  %1222 = vsyncmov %s1221
  %s1223 = vpop.sfrf %1222
  %p1224 = scmp.eq.s32.totalorder %s1223, 0
  %p1225 = pneg %p1224
  %1227 = shalt.err (%p1225)
  %s1228 = scalar_lea.sflag [#allocation3], 5
  %1229 = vsyncmov %s1228
  %s1230 = vpop.sfrf %1229
  %p1231 = scmp.eq.s32.totalorder %s1230, 0
  %p1232 = pneg %p1231
  %1234 = shalt.err (%p1232)
  %s1235 = scalar_lea.sflag [#allocation3], 6
  %1236 = vsyncmov %s1235
  %s1237 = vpop.sfrf %1236
  %p1238 = scmp.eq.s32.totalorder %s1237, 0
  %p1239 = pneg %p1238
  %1241 = shalt.err (%p1239)
  %s1242 = scalar_lea.sflag [#allocation3], 7
  %1243 = vsyncmov %s1242
  %s1244 = vpop.sfrf %1243
  %p1245 = scmp.eq.s32.totalorder %s1244, 0
  %p1246 = pneg %p1245
  %1248 = shalt.err (%p1246)

</llo_original>
